<compile_context>
chip_gen: v7x
topology: tpu7x:2x2x1
jax: 0.10.0
libtpu: 0.0.40
codegen_flags: <defaults>
</compile_context>

<pallas_src>
import functools

import jax
import jax.numpy as jnp
from jax import lax
from jax.experimental import pallas as pl
from jax.experimental.pallas import tpu as pltpu

# ----- synthetic config (db.cfg) --------------------------------------------
VOCAB = 50        # cfg.input_vocab_size
N_EMBED = 32      # cfg.n_embed
N_HIDDEN = 32     # cfg.n_src_hidden
N_SEG = 3         # sentences per instance (forward hard-codes 3 when stacking)
SLEN = 8          # max tokens per sentence
HID_PAD = 128     # lane-padded width of the final-hidden output block


def _round_up(x, m):
    return ((x + m - 1) // m) * m


def _detect_bf16_flags():
    """Returns (lookup_bf16, rnn_bf16, gate_bf16) based on the TPU generation."""
    try:
        kind = jax.devices()[0].device_kind.lower()
    except Exception:  # pragma: no cover - defensive
        kind = ''
    is_v5e = ('v5 lite' in kind) or ('v5lite' in kind) or ('v5e' in kind)
    is_v6_plus = ('v6' in kind) or ('v7' in kind) or ('tpu7' in kind)
    if is_v6_plus:
        return True, True, True      # bf16 MXU operands + bf16 EUP/VPU gate math
    if is_v5e:
        return True, False, False    # bf16 lookup matmul only; f32 gates (no bf16 VPU/EUP)
    return False, False, False       # v3/v4/v5p/unknown: stay exact f32


def _text_encoder_kernel(gate_dtype,
                         ids_ref,    # VMEM (RB, SLEN+1) int32  [tokens | len]
                         wgi_ref,    # VMEM (VOCAB, 3H)  fused emb @ W_ih  [r | z | n]
                         whh_ref,    # VMEM (H, 3H)      W_hh               [r | z | n]
                         rfts_ref,   # out  (RB, SLEN*H) f32  (lane dense)
                         hids_ref):  # out  (RB, HID_PAD) f32 (final hidden in lanes [0:H])
    RB = ids_ref.shape[0]
    H = N_HIDDEN

    ids_aug = ids_ref[...]                      # (RB, SLEN+1)
    ids = ids_aug[:, :SLEN]                     # (RB, SLEN)
    lens = ids_aug[:, SLEN:SLEN + 1]            # (RB, 1)
    w_gi = wgi_ref[...]                         # (VOCAB, 3H) f32 or bf16
    w_hh = whh_ref[...]                         # (H, 3H)     f32 or bf16

    # hoisted: one lane-iota reused for every timestep's one-hot compare
    iota_v = lax.broadcasted_iota(jnp.int32, (RB, VOCAB), 1)

    h = jnp.zeros((RB, H), jnp.float32)
    rft_cols = []
    # Static unroll over SLEN; positions t >= len freeze h and emit zeros,
    # matching the packed-sequence semantics of the reference.
    for t in range(SLEN):
        # fused embedding lookup + input projection: one MXU pass per step
        onehot_t = (ids[:, t:t + 1] == iota_v).astype(w_gi.dtype)        # (RB, VOCAB)
        gi = jnp.dot(onehot_t, w_gi, preferred_element_type=jnp.float32)  # (RB, 3H)
        gh = jnp.dot(h.astype(w_hh.dtype), w_hh,
                     preferred_element_type=jnp.float32)                  # (RB, 3H)

        # PyTorch GRU gate order (r, z, n); biases are const-0.
        rz_pre = (gi[:, :2 * H] + gh[:, :2 * H]).astype(gate_dtype)
        r = jax.nn.sigmoid(rz_pre[:, :H])
        z = jax.nn.sigmoid(rz_pre[:, H:])
        n_pre = (gi[:, 2 * H:] + r.astype(jnp.float32) * gh[:, 2 * H:]).astype(gate_dtype)
        n = jnp.tanh(n_pre)
        h_new = ((1.0 - z) * n).astype(jnp.float32) + z.astype(jnp.float32) * h

        m_t = lens > t                                                    # (RB, 1) bool
        rft_cols.append(jnp.where(m_t, h_new, 0.0))
        h = jnp.where(m_t, h_new, h)

    # single lane-dense full-tile stores
    rfts_ref[...] = jnp.concatenate(rft_cols, axis=1)                     # (RB, SLEN*H)
    hids_ref[...] = jnp.concatenate(
        [h, jnp.zeros((RB, HID_PAD - H), jnp.float32)], axis=1)           # (RB, HID_PAD)


def _pack_outputs(rfts4, embs4, hids_bjh, input_lens):
    """Densely re-pack per-segment outputs (variable lengths) — pure-JAX glue."""
    B, n_seg, slen, H = rfts4.shape
    E = embs4.shape[-1]
    T = n_seg * slen
    lens = input_lens.astype(jnp.int32)
    cums = jnp.concatenate(
        [jnp.zeros((B, 1), jnp.int32), jnp.cumsum(lens, axis=1)], axis=1)   # (B, n_seg+1)
    tlen = cums[:, -1]                                                      # (B,)
    t = jnp.arange(T, dtype=jnp.int32)
    seg = jnp.sum((t[None, :, None] >= cums[:, None, 1:n_seg]).astype(jnp.int32),
                  axis=-1)                                                  # (B, T)
    pos = t[None, :] - jnp.take_along_axis(cums, seg, axis=1)               # (B, T)
    src = jnp.clip(seg * slen + pos, 0, T - 1)                              # (B, T)
    msks = (t[None, :] < tlen[:, None]).astype(jnp.float32)                 # (B, T)

    def _pack(raw4):
        flat = raw4.reshape(B, T, raw4.shape[-1])
        return jnp.take_along_axis(flat, src[:, :, None], axis=1) * msks[:, :, None]

    return {
        'rfts': _pack(rfts4),                    # (B, N_SEG*SLEN, N_HIDDEN)
        'embs': _pack(embs4),                    # (B, N_SEG*SLEN, N_EMBED)
        'msks': msks,                            # (B, N_SEG*SLEN)
        # list of N_SEG hiddens, each (num_layers*num_dirs=1, B, N_HIDDEN)
        'hids': [jnp.transpose(hids_bjh[:, j:j + 1, :], (1, 0, 2)) for j in range(n_seg)],
    }


def text_encoder_forward(input_inds, input_lens, params, row_block=512, use_bf16=None):
    """input_inds: (B, N_SEG, SLEN) int; input_lens: (B, N_SEG) int."""
    B, n_seg, slen = input_inds.shape
    H, E = N_HIDDEN, N_EMBED
    R = B * n_seg

    if use_bf16 is None:
        lookup_bf16, rnn_bf16, gate_bf16 = _detect_bf16_flags()
    else:
        lookup_bf16 = rnn_bf16 = gate_bf16 = bool(use_bf16)
    lookup_dtype = jnp.bfloat16 if lookup_bf16 else jnp.float32
    rnn_dtype = jnp.bfloat16 if rnn_bf16 else jnp.float32
    gate_dtype = jnp.bfloat16 if gate_bf16 else jnp.float32

    # fused RHS: one-hot lookup and input projection become a single matmul
    w_gi = jnp.dot(params['emb'], params['w_ih'],
                   preferred_element_type=jnp.float32).astype(lookup_dtype)  # (VOCAB, 3H)
    w_hh = params['w_hh'].astype(rnn_dtype)                                  # (H, 3H)

    # Rows per grid step: big blocks to amortize the serial GRU chain, but keep
    # >= 2 grid steps so both v7x TensorCores get work (dimension_semantics parallel).
    RB = _round_up(min(row_block, max(1, -(-R // 2))), 8)
    R_pad = max(_round_up(R, RB), 2 * RB)
    grid = R_pad // RB

    ids_flat = input_inds.reshape(R, slen).astype(jnp.int32)
    lens_flat = input_lens.reshape(R, 1).astype(jnp.int32)
    ids_aug = jnp.concatenate([ids_flat, lens_flat], axis=1)                 # (R, SLEN+1)
    pad = R_pad - R
    if pad:
        ids_aug = jnp.pad(ids_aug, ((0, pad), (0, 0)))                       # padded rows: len=0

    kernel = functools.partial(_text_encoder_kernel, gate_dtype)

    rfts_raw, hids_raw = pl.pallas_call(
        kernel,
        out_shape=(
            jax.ShapeDtypeStruct((R_pad, slen * H), jnp.float32),
            jax.ShapeDtypeStruct((R_pad, HID_PAD), jnp.float32),
        ),
        grid_spec=pltpu.PrefetchScalarGridSpec(
            num_scalar_prefetch=0,
            grid=(grid,),
            in_specs=[
                pl.BlockSpec((RB, slen + 1),   lambda i: (i, 0)),
                pl.BlockSpec((VOCAB, 3 * H),   lambda i: (0, 0)),
                pl.BlockSpec((H, 3 * H),       lambda i: (0, 0)),
            ],
            out_specs=[
                pl.BlockSpec((RB, slen * H),   lambda i: (i, 0)),
                pl.BlockSpec((RB, HID_PAD),    lambda i: (i, 0)),
            ],
        ),
        compiler_params=pltpu.CompilerParams(
            dimension_semantics=("parallel",),
            vmem_limit_bytes=32 * 1024 * 1024,
        ),
    )(ids_aug, w_gi, w_hh)

    rfts4 = rfts_raw[:R].reshape(B, n_seg, slen, H)
    hids_bjh = hids_raw[:R, :H].reshape(B, n_seg, H)
    # embs as a plain exact XLA gather (kept out of the kernel's store traffic)
    embs4 = jnp.take(params['emb'], ids_flat, axis=0).reshape(B, n_seg, slen, E)

    return _pack_outputs(rfts4, embs4, hids_bjh, input_lens)


def _gru_reference(input_inds, input_lens, params):
    """Pure-JAX f32 reference of the same forward (for tolerance checking)."""
    B, n_seg, slen = input_inds.shape
    H, E = N_HIDDEN, N_EMBED
    R = B * n_seg
    ids = input_inds.reshape(R, slen).astype(jnp.int32)
    lens = input_lens.reshape(R).astype(jnp.int32)
    x = jnp.take(params['emb'], ids, axis=0)                     # (R, slen, E)
    w_ih, w_hh = params['w_ih'], params['w_hh']

    def step(h, inp):
        xt, mt = inp                                             # (R,E), (R,1)
        gi = xt @ w_ih
        gh = h @ w_hh
        r = jax.nn.sigmoid(gi[:, :H] + gh[:, :H])
        z = jax.nn.sigmoid(gi[:, H:2 * H] + gh[:, H:2 * H])
        n = jnp.tanh(gi[:, 2 * H:] + r * gh[:, 2 * H:])
        h_new = (1.0 - z) * n + z * h
        valid = mt > 0
        return jnp.where(valid, h_new, h), jnp.where(valid, h_new, 0.0)

    mt = (jnp.arange(slen)[None, :] < lens[:, None]).astype(jnp.float32)   # (R, slen)
    xs = (jnp.swapaxes(x, 0, 1), jnp.swapaxes(mt, 0, 1)[..., None])
    h_last, rft_t = lax.scan(step, jnp.zeros((R, H), jnp.float32), xs)
    rfts4 = jnp.swapaxes(rft_t, 0, 1).reshape(B, n_seg, slen, H)
    embs4 = x.reshape(B, n_seg, slen, E)
    hids_bjh = h_last.reshape(B, n_seg, H)
    return _pack_outputs(rfts4, embs4, hids_bjh, input_lens)


def init_params(key):
    k_emb, k_ih, k_hh = jax.random.split(key, 3)
    H = N_HIDDEN
    # embedding weights stand in for db.lang_vocab.vectors
    emb = jax.random.normal(k_emb, (VOCAB, N_EMBED), jnp.float32)
    # xavier_uniform on weight_ih (3H, E) / weight_hh (3H, H), stored transposed:
    # columns [0:H]=r, [H:2H]=z, [2H:3H]=n (PyTorch gate order).
    bound_ih = (6.0 / (3 * H + N_EMBED)) ** 0.5
    bound_hh = (6.0 / (3 * H + H)) ** 0.5
    w_ih = jax.random.uniform(k_ih, (N_EMBED, 3 * H), jnp.float32, -bound_ih, bound_ih)
    w_hh = jax.random.uniform(k_hh, (H, 3 * H), jnp.float32, -bound_hh, bound_hh)
    # GRU biases are nn.init.constant_(0.0) in the module, so they are omitted.
    return {'emb': emb, 'w_ih': w_ih, 'w_hh': w_hh}


if __name__ == "__main__":
    key = jax.random.PRNGKey(0)
    kp, ki, kl = jax.random.split(key, 3)
    params = init_params(kp)

    B = 2
    input_inds = jax.random.randint(ki, (B, N_SEG, SLEN), 0, VOCAB, dtype=jnp.int32)
    input_lens = jax.random.randint(kl, (B, N_SEG), 1, SLEN + 1, dtype=jnp.int32)

    out = text_encoder_forward(input_inds, input_lens, params)
    jax.block_until_ready(out)

    assert out['rfts'].shape == (B, N_SEG * SLEN, N_HIDDEN)
    assert out['embs'].shape == (B, N_SEG * SLEN, N_EMBED)
    assert out['msks'].shape == (B, N_SEG * SLEN)
    assert len(out['hids']) == N_SEG and out['hids'][0].shape == (1, B, N_HIDDEN)
    assert bool(jnp.isfinite(out['rfts']).all()) and bool(jnp.isfinite(out['embs']).all())

    # tolerance check vs a pure-JAX f32 reference (loose enough for the bf16 path)
    ref = _gru_reference(input_inds, input_lens, params)
    errs = [jnp.max(jnp.abs(out['rfts'] - ref['rfts'])),
            jnp.max(jnp.abs(out['embs'] - ref['embs'])),
            jnp.max(jnp.abs(out['msks'] - ref['msks']))]
    errs += [jnp.max(jnp.abs(out['hids'][j] - ref['hids'][j])) for j in range(N_SEG)]
    max_err = float(jnp.max(jnp.stack(errs)))
    assert max_err < 1e-1, f"max abs diff vs reference too large: {max_err}"

    print("KERNEL_OK")
</pallas_src>

<mosaic_0001>
module attributes {stable_mosaic.version = 11 : i64} {
  func.func @_text_encoder_kernel(%arg0: i32, %arg1: memref<8x9xi32, #tpu.memory_space<vmem>>, %arg2: memref<50x96xf32, #tpu.memory_space<vmem>>, %arg3: memref<32x96xf32, #tpu.memory_space<vmem>>, %arg4: memref<8x256xf32, #tpu.memory_space<vmem>>, %arg5: memref<8x128xf32, #tpu.memory_space<vmem>>) attributes {dimension_semantics = [#tpu.dimension_semantics<parallel>], iteration_bounds = array<i64: 2>, scalar_prefetch = 0 : i64, scratch_operands = 0 : i64, tpu.core_type = #tpu.core_type<tc>, window_params = [{transform_indices = @transform_0, window_bounds = array<i64: 8, 9>}, {pipeline_mode = #tpu.pipeline_mode<synchronous>, transform_indices = @transform_1, window_bounds = array<i64: 50, 96>}, {pipeline_mode = #tpu.pipeline_mode<synchronous>, transform_indices = @transform_2, window_bounds = array<i64: 32, 96>}, {transform_indices = @transform_3, window_bounds = array<i64: 8, 256>}, {transform_indices = @transform_4, window_bounds = array<i64: 8, 128>}]} {
    %c0 = arith.constant 0 : index
    %c0_0 = arith.constant 0 : index
    %0 = vector.load %arg1[%c0, %c0_0] : memref<8x9xi32, #tpu.memory_space<vmem>>, vector<8x9xi32>
    %1 = vector.extract_strided_slice %0 {offsets = [0, 0], sizes = [8, 8], strides = [1, 1]} : vector<8x9xi32> to vector<8x8xi32>
    %2 = vector.extract_strided_slice %0 {offsets = [0, 8], sizes = [8, 1], strides = [1, 1]} : vector<8x9xi32> to vector<8x1xi32>
    %c0_1 = arith.constant 0 : index
    %c0_2 = arith.constant 0 : index
    %3 = vector.load %arg2[%c0_1, %c0_2] : memref<50x96xf32, #tpu.memory_space<vmem>>, vector<50x96xf32>
    %c0_3 = arith.constant 0 : index
    %c0_4 = arith.constant 0 : index
    %4 = vector.load %arg3[%c0_3, %c0_4] : memref<32x96xf32, #tpu.memory_space<vmem>>, vector<32x96xf32>
    %5 = tpu.iota {dimensions = array<i32: 1>} : vector<8x50xi32>
    %cst = arith.constant 0.000000e+00 : f32
    %6 = vector.broadcast %cst : f32 to vector<8x32xf32>
    %7 = vector.extract_strided_slice %1 {offsets = [0, 0], sizes = [8, 1], strides = [1, 1]} : vector<8x8xi32> to vector<8x1xi32>
    %8 = vector.broadcast %7 : vector<8x1xi32> to vector<8x50xi32>
    %9 = arith.cmpi eq, %8, %5 : vector<8x50xi32>
    %10 = arith.extui %9 : vector<8x50xi1> to vector<8x50xi32>
    %11 = arith.sitofp %10 : vector<8x50xi32> to vector<8x50xf32>
    %cst_5 = arith.constant dense<0.000000e+00> : vector<8x96xf32>
    %12 = tpu.matmul %11, %3, %cst_5 {dimension_numbers = #tpu.dot_dimension_numbers<[1], [0], [0], [1], [0, 0, 1, 1], [], []>} : vector<8x50xf32>, vector<50x96xf32>, vector<8x96xf32> -> vector<8x96xf32>
    %cst_6 = arith.constant dense<0.000000e+00> : vector<8x96xf32>
    %13 = tpu.matmul %6, %4, %cst_6 {dimension_numbers = #tpu.dot_dimension_numbers<[1], [0], [0], [1], [0, 0, 1, 1], [], []>} : vector<8x32xf32>, vector<32x96xf32>, vector<8x96xf32> -> vector<8x96xf32>
    %14 = vector.extract_strided_slice %12 {offsets = [0, 0], sizes = [8, 64], strides = [1, 1]} : vector<8x96xf32> to vector<8x64xf32>
    %15 = vector.extract_strided_slice %13 {offsets = [0, 0], sizes = [8, 64], strides = [1, 1]} : vector<8x96xf32> to vector<8x64xf32>
    %16 = arith.addf %14, %15 : vector<8x64xf32>
    %17 = vector.extract_strided_slice %16 {offsets = [0, 0], sizes = [8, 32], strides = [1, 1]} : vector<8x64xf32> to vector<8x32xf32>
    %18 = arith.negf %17 : vector<8x32xf32>
    %19 = math.exp %18 : vector<8x32xf32>
    %cst_7 = arith.constant 1.000000e+00 : f32
    %20 = vector.broadcast %cst_7 : f32 to vector<8x32xf32>
    %21 = arith.addf %20, %19 : vector<8x32xf32>
    %22 = arith.divf %20, %21 : vector<8x32xf32>
    %23 = vector.extract_strided_slice %16 {offsets = [0, 32], sizes = [8, 32], strides = [1, 1]} : vector<8x64xf32> to vector<8x32xf32>
    %24 = arith.negf %23 : vector<8x32xf32>
    %25 = math.exp %24 : vector<8x32xf32>
    %cst_8 = arith.constant 1.000000e+00 : f32
    %26 = vector.broadcast %cst_8 : f32 to vector<8x32xf32>
    %27 = arith.addf %26, %25 : vector<8x32xf32>
    %28 = arith.divf %26, %27 : vector<8x32xf32>
    %29 = vector.extract_strided_slice %12 {offsets = [0, 64], sizes = [8, 32], strides = [1, 1]} : vector<8x96xf32> to vector<8x32xf32>
    %30 = vector.extract_strided_slice %13 {offsets = [0, 64], sizes = [8, 32], strides = [1, 1]} : vector<8x96xf32> to vector<8x32xf32>
    %31 = arith.mulf %22, %30 : vector<8x32xf32>
    %32 = arith.addf %29, %31 : vector<8x32xf32>
    %33 = math.tanh %32 : vector<8x32xf32>
    %cst_9 = arith.constant 1.000000e+00 : f32
    %34 = vector.broadcast %cst_9 : f32 to vector<8x32xf32>
    %35 = arith.subf %34, %28 : vector<8x32xf32>
    %36 = arith.mulf %35, %33 : vector<8x32xf32>
    %37 = arith.mulf %28, %6 : vector<8x32xf32>
    %38 = arith.addf %36, %37 : vector<8x32xf32>
    %c0_i32 = arith.constant 0 : i32
    %39 = vector.broadcast %c0_i32 : i32 to vector<8x1xi32>
    %40 = arith.cmpi sgt, %2, %39 : vector<8x1xi32>
    %cst_10 = arith.constant 0.000000e+00 : f32
    %41 = vector.shape_cast %40 : vector<8x1xi1> to vector<8x1xi1>
    %42 = vector.broadcast %41 : vector<8x1xi1> to vector<8x32xi1>
    %43 = vector.broadcast %cst_10 : f32 to vector<8x32xf32>
    %44 = arith.select %42, %38, %43 : vector<8x32xi1>, vector<8x32xf32>
    %45 = vector.shape_cast %40 : vector<8x1xi1> to vector<8x1xi1>
    %46 = vector.broadcast %45 : vector<8x1xi1> to vector<8x32xi1>
    %47 = arith.select %46, %38, %6 : vector<8x32xi1>, vector<8x32xf32>
    %48 = vector.extract_strided_slice %1 {offsets = [0, 1], sizes = [8, 1], strides = [1, 1]} : vector<8x8xi32> to vector<8x1xi32>
    %49 = vector.broadcast %48 : vector<8x1xi32> to vector<8x50xi32>
    %50 = arith.cmpi eq, %49, %5 : vector<8x50xi32>
    %51 = arith.extui %50 : vector<8x50xi1> to vector<8x50xi32>
    %52 = arith.sitofp %51 : vector<8x50xi32> to vector<8x50xf32>
    %cst_11 = arith.constant dense<0.000000e+00> : vector<8x96xf32>
    %53 = tpu.matmul %52, %3, %cst_11 {dimension_numbers = #tpu.dot_dimension_numbers<[1], [0], [0], [1], [0, 0, 1, 1], [], []>} : vector<8x50xf32>, vector<50x96xf32>, vector<8x96xf32> -> vector<8x96xf32>
    %cst_12 = arith.constant dense<0.000000e+00> : vector<8x96xf32>
    %54 = tpu.matmul %47, %4, %cst_12 {dimension_numbers = #tpu.dot_dimension_numbers<[1], [0], [0], [1], [0, 0, 1, 1], [], []>} : vector<8x32xf32>, vector<32x96xf32>, vector<8x96xf32> -> vector<8x96xf32>
    %55 = vector.extract_strided_slice %53 {offsets = [0, 0], sizes = [8, 64], strides = [1, 1]} : vector<8x96xf32> to vector<8x64xf32>
    %56 = vector.extract_strided_slice %54 {offsets = [0, 0], sizes = [8, 64], strides = [1, 1]} : vector<8x96xf32> to vector<8x64xf32>
    %57 = arith.addf %55, %56 : vector<8x64xf32>
    %58 = vector.extract_strided_slice %57 {offsets = [0, 0], sizes = [8, 32], strides = [1, 1]} : vector<8x64xf32> to vector<8x32xf32>
    %59 = arith.negf %58 : vector<8x32xf32>
    %60 = math.exp %59 : vector<8x32xf32>
    %cst_13 = arith.constant 1.000000e+00 : f32
    %61 = vector.broadcast %cst_13 : f32 to vector<8x32xf32>
    %62 = arith.addf %61, %60 : vector<8x32xf32>
    %63 = arith.divf %61, %62 : vector<8x32xf32>
    %64 = vector.extract_strided_slice %57 {offsets = [0, 32], sizes = [8, 32], strides = [1, 1]} : vector<8x64xf32> to vector<8x32xf32>
    %65 = arith.negf %64 : vector<8x32xf32>
    %66 = math.exp %65 : vector<8x32xf32>
    %cst_14 = arith.constant 1.000000e+00 : f32
    %67 = vector.broadcast %cst_14 : f32 to vector<8x32xf32>
    %68 = arith.addf %67, %66 : vector<8x32xf32>
    %69 = arith.divf %67, %68 : vector<8x32xf32>
    %70 = vector.extract_strided_slice %53 {offsets = [0, 64], sizes = [8, 32], strides = [1, 1]} : vector<8x96xf32> to vector<8x32xf32>
    %71 = vector.extract_strided_slice %54 {offsets = [0, 64], sizes = [8, 32], strides = [1, 1]} : vector<8x96xf32> to vector<8x32xf32>
    %72 = arith.mulf %63, %71 : vector<8x32xf32>
    %73 = arith.addf %70, %72 : vector<8x32xf32>
    %74 = math.tanh %73 : vector<8x32xf32>
    %cst_15 = arith.constant 1.000000e+00 : f32
    %75 = vector.broadcast %cst_15 : f32 to vector<8x32xf32>
    %76 = arith.subf %75, %69 : vector<8x32xf32>
    %77 = arith.mulf %76, %74 : vector<8x32xf32>
    %78 = arith.mulf %69, %47 : vector<8x32xf32>
    %79 = arith.addf %77, %78 : vector<8x32xf32>
    %c1_i32 = arith.constant 1 : i32
    %80 = vector.broadcast %c1_i32 : i32 to vector<8x1xi32>
    %81 = arith.cmpi sgt, %2, %80 : vector<8x1xi32>
    %cst_16 = arith.constant 0.000000e+00 : f32
    %82 = vector.shape_cast %81 : vector<8x1xi1> to vector<8x1xi1>
    %83 = vector.broadcast %82 : vector<8x1xi1> to vector<8x32xi1>
    %84 = vector.broadcast %cst_16 : f32 to vector<8x32xf32>
    %85 = arith.select %83, %79, %84 : vector<8x32xi1>, vector<8x32xf32>
    %86 = vector.shape_cast %81 : vector<8x1xi1> to vector<8x1xi1>
    %87 = vector.broadcast %86 : vector<8x1xi1> to vector<8x32xi1>
    %88 = arith.select %87, %79, %47 : vector<8x32xi1>, vector<8x32xf32>
    %89 = vector.extract_strided_slice %1 {offsets = [0, 2], sizes = [8, 1], strides = [1, 1]} : vector<8x8xi32> to vector<8x1xi32>
    %90 = vector.broadcast %89 : vector<8x1xi32> to vector<8x50xi32>
    %91 = arith.cmpi eq, %90, %5 : vector<8x50xi32>
    %92 = arith.extui %91 : vector<8x50xi1> to vector<8x50xi32>
    %93 = arith.sitofp %92 : vector<8x50xi32> to vector<8x50xf32>
    %cst_17 = arith.constant dense<0.000000e+00> : vector<8x96xf32>
    %94 = tpu.matmul %93, %3, %cst_17 {dimension_numbers = #tpu.dot_dimension_numbers<[1], [0], [0], [1], [0, 0, 1, 1], [], []>} : vector<8x50xf32>, vector<50x96xf32>, vector<8x96xf32> -> vector<8x96xf32>
    %cst_18 = arith.constant dense<0.000000e+00> : vector<8x96xf32>
    %95 = tpu.matmul %88, %4, %cst_18 {dimension_numbers = #tpu.dot_dimension_numbers<[1], [0], [0], [1], [0, 0, 1, 1], [], []>} : vector<8x32xf32>, vector<32x96xf32>, vector<8x96xf32> -> vector<8x96xf32>
    %96 = vector.extract_strided_slice %94 {offsets = [0, 0], sizes = [8, 64], strides = [1, 1]} : vector<8x96xf32> to vector<8x64xf32>
    %97 = vector.extract_strided_slice %95 {offsets = [0, 0], sizes = [8, 64], strides = [1, 1]} : vector<8x96xf32> to vector<8x64xf32>
    %98 = arith.addf %96, %97 : vector<8x64xf32>
    %99 = vector.extract_strided_slice %98 {offsets = [0, 0], sizes = [8, 32], strides = [1, 1]} : vector<8x64xf32> to vector<8x32xf32>
    %100 = arith.negf %99 : vector<8x32xf32>
    %101 = math.exp %100 : vector<8x32xf32>
    %cst_19 = arith.constant 1.000000e+00 : f32
    %102 = vector.broadcast %cst_19 : f32 to vector<8x32xf32>
    %103 = arith.addf %102, %101 : vector<8x32xf32>
    %104 = arith.divf %102, %103 : vector<8x32xf32>
    %105 = vector.extract_strided_slice %98 {offsets = [0, 32], sizes = [8, 32], strides = [1, 1]} : vector<8x64xf32> to vector<8x32xf32>
    %106 = arith.negf %105 : vector<8x32xf32>
    %107 = math.exp %106 : vector<8x32xf32>
    %cst_20 = arith.constant 1.000000e+00 : f32
    %108 = vector.broadcast %cst_20 : f32 to vector<8x32xf32>
    %109 = arith.addf %108, %107 : vector<8x32xf32>
    %110 = arith.divf %108, %109 : vector<8x32xf32>
    %111 = vector.extract_strided_slice %94 {offsets = [0, 64], sizes = [8, 32], strides = [1, 1]} : vector<8x96xf32> to vector<8x32xf32>
    %112 = vector.extract_strided_slice %95 {offsets = [0, 64], sizes = [8, 32], strides = [1, 1]} : vector<8x96xf32> to vector<8x32xf32>
    %113 = arith.mulf %104, %112 : vector<8x32xf32>
    %114 = arith.addf %111, %113 : vector<8x32xf32>
    %115 = math.tanh %114 : vector<8x32xf32>
    %cst_21 = arith.constant 1.000000e+00 : f32
    %116 = vector.broadcast %cst_21 : f32 to vector<8x32xf32>
    %117 = arith.subf %116, %110 : vector<8x32xf32>
    %118 = arith.mulf %117, %115 : vector<8x32xf32>
    %119 = arith.mulf %110, %88 : vector<8x32xf32>
    %120 = arith.addf %118, %119 : vector<8x32xf32>
    %c2_i32 = arith.constant 2 : i32
    %121 = vector.broadcast %c2_i32 : i32 to vector<8x1xi32>
    %122 = arith.cmpi sgt, %2, %121 : vector<8x1xi32>
    %cst_22 = arith.constant 0.000000e+00 : f32
    %123 = vector.shape_cast %122 : vector<8x1xi1> to vector<8x1xi1>
    %124 = vector.broadcast %123 : vector<8x1xi1> to vector<8x32xi1>
    %125 = vector.broadcast %cst_22 : f32 to vector<8x32xf32>
    %126 = arith.select %124, %120, %125 : vector<8x32xi1>, vector<8x32xf32>
    %127 = vector.shape_cast %122 : vector<8x1xi1> to vector<8x1xi1>
    %128 = vector.broadcast %127 : vector<8x1xi1> to vector<8x32xi1>
    %129 = arith.select %128, %120, %88 : vector<8x32xi1>, vector<8x32xf32>
    %130 = vector.extract_strided_slice %1 {offsets = [0, 3], sizes = [8, 1], strides = [1, 1]} : vector<8x8xi32> to vector<8x1xi32>
    %131 = vector.broadcast %130 : vector<8x1xi32> to vector<8x50xi32>
    %132 = arith.cmpi eq, %131, %5 : vector<8x50xi32>
    %133 = arith.extui %132 : vector<8x50xi1> to vector<8x50xi32>
    %134 = arith.sitofp %133 : vector<8x50xi32> to vector<8x50xf32>
    %cst_23 = arith.constant dense<0.000000e+00> : vector<8x96xf32>
    %135 = tpu.matmul %134, %3, %cst_23 {dimension_numbers = #tpu.dot_dimension_numbers<[1], [0], [0], [1], [0, 0, 1, 1], [], []>} : vector<8x50xf32>, vector<50x96xf32>, vector<8x96xf32> -> vector<8x96xf32>
    %cst_24 = arith.constant dense<0.000000e+00> : vector<8x96xf32>
    %136 = tpu.matmul %129, %4, %cst_24 {dimension_numbers = #tpu.dot_dimension_numbers<[1], [0], [0], [1], [0, 0, 1, 1], [], []>} : vector<8x32xf32>, vector<32x96xf32>, vector<8x96xf32> -> vector<8x96xf32>
    %137 = vector.extract_strided_slice %135 {offsets = [0, 0], sizes = [8, 64], strides = [1, 1]} : vector<8x96xf32> to vector<8x64xf32>
    %138 = vector.extract_strided_slice %136 {offsets = [0, 0], sizes = [8, 64], strides = [1, 1]} : vector<8x96xf32> to vector<8x64xf32>
    %139 = arith.addf %137, %138 : vector<8x64xf32>
    %140 = vector.extract_strided_slice %139 {offsets = [0, 0], sizes = [8, 32], strides = [1, 1]} : vector<8x64xf32> to vector<8x32xf32>
    %141 = arith.negf %140 : vector<8x32xf32>
    %142 = math.exp %141 : vector<8x32xf32>
    %cst_25 = arith.constant 1.000000e+00 : f32
    %143 = vector.broadcast %cst_25 : f32 to vector<8x32xf32>
    %144 = arith.addf %143, %142 : vector<8x32xf32>
    %145 = arith.divf %143, %144 : vector<8x32xf32>
    %146 = vector.extract_strided_slice %139 {offsets = [0, 32], sizes = [8, 32], strides = [1, 1]} : vector<8x64xf32> to vector<8x32xf32>
    %147 = arith.negf %146 : vector<8x32xf32>
    %148 = math.exp %147 : vector<8x32xf32>
    %cst_26 = arith.constant 1.000000e+00 : f32
    %149 = vector.broadcast %cst_26 : f32 to vector<8x32xf32>
    %150 = arith.addf %149, %148 : vector<8x32xf32>
    %151 = arith.divf %149, %150 : vector<8x32xf32>
    %152 = vector.extract_strided_slice %135 {offsets = [0, 64], sizes = [8, 32], strides = [1, 1]} : vector<8x96xf32> to vector<8x32xf32>
    %153 = vector.extract_strided_slice %136 {offsets = [0, 64], sizes = [8, 32], strides = [1, 1]} : vector<8x96xf32> to vector<8x32xf32>
    %154 = arith.mulf %145, %153 : vector<8x32xf32>
    %155 = arith.addf %152, %154 : vector<8x32xf32>
    %156 = math.tanh %155 : vector<8x32xf32>
    %cst_27 = arith.constant 1.000000e+00 : f32
    %157 = vector.broadcast %cst_27 : f32 to vector<8x32xf32>
    %158 = arith.subf %157, %151 : vector<8x32xf32>
    %159 = arith.mulf %158, %156 : vector<8x32xf32>
    %160 = arith.mulf %151, %129 : vector<8x32xf32>
    %161 = arith.addf %159, %160 : vector<8x32xf32>
    %c3_i32 = arith.constant 3 : i32
    %162 = vector.broadcast %c3_i32 : i32 to vector<8x1xi32>
    %163 = arith.cmpi sgt, %2, %162 : vector<8x1xi32>
    %cst_28 = arith.constant 0.000000e+00 : f32
    %164 = vector.shape_cast %163 : vector<8x1xi1> to vector<8x1xi1>
    %165 = vector.broadcast %164 : vector<8x1xi1> to vector<8x32xi1>
    %166 = vector.broadcast %cst_28 : f32 to vector<8x32xf32>
    %167 = arith.select %165, %161, %166 : vector<8x32xi1>, vector<8x32xf32>
    %168 = vector.shape_cast %163 : vector<8x1xi1> to vector<8x1xi1>
    %169 = vector.broadcast %168 : vector<8x1xi1> to vector<8x32xi1>
    %170 = arith.select %169, %161, %129 : vector<8x32xi1>, vector<8x32xf32>
    %171 = vector.extract_strided_slice %1 {offsets = [0, 4], sizes = [8, 1], strides = [1, 1]} : vector<8x8xi32> to vector<8x1xi32>
    %172 = vector.broadcast %171 : vector<8x1xi32> to vector<8x50xi32>
    %173 = arith.cmpi eq, %172, %5 : vector<8x50xi32>
    %174 = arith.extui %173 : vector<8x50xi1> to vector<8x50xi32>
    %175 = arith.sitofp %174 : vector<8x50xi32> to vector<8x50xf32>
    %cst_29 = arith.constant dense<0.000000e+00> : vector<8x96xf32>
    %176 = tpu.matmul %175, %3, %cst_29 {dimension_numbers = #tpu.dot_dimension_numbers<[1], [0], [0], [1], [0, 0, 1, 1], [], []>} : vector<8x50xf32>, vector<50x96xf32>, vector<8x96xf32> -> vector<8x96xf32>
    %cst_30 = arith.constant dense<0.000000e+00> : vector<8x96xf32>
    %177 = tpu.matmul %170, %4, %cst_30 {dimension_numbers = #tpu.dot_dimension_numbers<[1], [0], [0], [1], [0, 0, 1, 1], [], []>} : vector<8x32xf32>, vector<32x96xf32>, vector<8x96xf32> -> vector<8x96xf32>
    %178 = vector.extract_strided_slice %176 {offsets = [0, 0], sizes = [8, 64], strides = [1, 1]} : vector<8x96xf32> to vector<8x64xf32>
    %179 = vector.extract_strided_slice %177 {offsets = [0, 0], sizes = [8, 64], strides = [1, 1]} : vector<8x96xf32> to vector<8x64xf32>
    %180 = arith.addf %178, %179 : vector<8x64xf32>
    %181 = vector.extract_strided_slice %180 {offsets = [0, 0], sizes = [8, 32], strides = [1, 1]} : vector<8x64xf32> to vector<8x32xf32>
    %182 = arith.negf %181 : vector<8x32xf32>
    %183 = math.exp %182 : vector<8x32xf32>
    %cst_31 = arith.constant 1.000000e+00 : f32
    %184 = vector.broadcast %cst_31 : f32 to vector<8x32xf32>
    %185 = arith.addf %184, %183 : vector<8x32xf32>
    %186 = arith.divf %184, %185 : vector<8x32xf32>
    %187 = vector.extract_strided_slice %180 {offsets = [0, 32], sizes = [8, 32], strides = [1, 1]} : vector<8x64xf32> to vector<8x32xf32>
    %188 = arith.negf %187 : vector<8x32xf32>
    %189 = math.exp %188 : vector<8x32xf32>
    %cst_32 = arith.constant 1.000000e+00 : f32
    %190 = vector.broadcast %cst_32 : f32 to vector<8x32xf32>
    %191 = arith.addf %190, %189 : vector<8x32xf32>
    %192 = arith.divf %190, %191 : vector<8x32xf32>
    %193 = vector.extract_strided_slice %176 {offsets = [0, 64], sizes = [8, 32], strides = [1, 1]} : vector<8x96xf32> to vector<8x32xf32>
    %194 = vector.extract_strided_slice %177 {offsets = [0, 64], sizes = [8, 32], strides = [1, 1]} : vector<8x96xf32> to vector<8x32xf32>
    %195 = arith.mulf %186, %194 : vector<8x32xf32>
    %196 = arith.addf %193, %195 : vector<8x32xf32>
    %197 = math.tanh %196 : vector<8x32xf32>
    %cst_33 = arith.constant 1.000000e+00 : f32
    %198 = vector.broadcast %cst_33 : f32 to vector<8x32xf32>
    %199 = arith.subf %198, %192 : vector<8x32xf32>
    %200 = arith.mulf %199, %197 : vector<8x32xf32>
    %201 = arith.mulf %192, %170 : vector<8x32xf32>
    %202 = arith.addf %200, %201 : vector<8x32xf32>
    %c4_i32 = arith.constant 4 : i32
    %203 = vector.broadcast %c4_i32 : i32 to vector<8x1xi32>
    %204 = arith.cmpi sgt, %2, %203 : vector<8x1xi32>
    %cst_34 = arith.constant 0.000000e+00 : f32
    %205 = vector.shape_cast %204 : vector<8x1xi1> to vector<8x1xi1>
    %206 = vector.broadcast %205 : vector<8x1xi1> to vector<8x32xi1>
    %207 = vector.broadcast %cst_34 : f32 to vector<8x32xf32>
    %208 = arith.select %206, %202, %207 : vector<8x32xi1>, vector<8x32xf32>
    %209 = vector.shape_cast %204 : vector<8x1xi1> to vector<8x1xi1>
    %210 = vector.broadcast %209 : vector<8x1xi1> to vector<8x32xi1>
    %211 = arith.select %210, %202, %170 : vector<8x32xi1>, vector<8x32xf32>
    %212 = vector.extract_strided_slice %1 {offsets = [0, 5], sizes = [8, 1], strides = [1, 1]} : vector<8x8xi32> to vector<8x1xi32>
    %213 = vector.broadcast %212 : vector<8x1xi32> to vector<8x50xi32>
    %214 = arith.cmpi eq, %213, %5 : vector<8x50xi32>
    %215 = arith.extui %214 : vector<8x50xi1> to vector<8x50xi32>
    %216 = arith.sitofp %215 : vector<8x50xi32> to vector<8x50xf32>
    %cst_35 = arith.constant dense<0.000000e+00> : vector<8x96xf32>
    %217 = tpu.matmul %216, %3, %cst_35 {dimension_numbers = #tpu.dot_dimension_numbers<[1], [0], [0], [1], [0, 0, 1, 1], [], []>} : vector<8x50xf32>, vector<50x96xf32>, vector<8x96xf32> -> vector<8x96xf32>
    %cst_36 = arith.constant dense<0.000000e+00> : vector<8x96xf32>
    %218 = tpu.matmul %211, %4, %cst_36 {dimension_numbers = #tpu.dot_dimension_numbers<[1], [0], [0], [1], [0, 0, 1, 1], [], []>} : vector<8x32xf32>, vector<32x96xf32>, vector<8x96xf32> -> vector<8x96xf32>
    %219 = vector.extract_strided_slice %217 {offsets = [0, 0], sizes = [8, 64], strides = [1, 1]} : vector<8x96xf32> to vector<8x64xf32>
    %220 = vector.extract_strided_slice %218 {offsets = [0, 0], sizes = [8, 64], strides = [1, 1]} : vector<8x96xf32> to vector<8x64xf32>
    %221 = arith.addf %219, %220 : vector<8x64xf32>
    %222 = vector.extract_strided_slice %221 {offsets = [0, 0], sizes = [8, 32], strides = [1, 1]} : vector<8x64xf32> to vector<8x32xf32>
    %223 = arith.negf %222 : vector<8x32xf32>
    %224 = math.exp %223 : vector<8x32xf32>
    %cst_37 = arith.constant 1.000000e+00 : f32
    %225 = vector.broadcast %cst_37 : f32 to vector<8x32xf32>
    %226 = arith.addf %225, %224 : vector<8x32xf32>
    %227 = arith.divf %225, %226 : vector<8x32xf32>
    %228 = vector.extract_strided_slice %221 {offsets = [0, 32], sizes = [8, 32], strides = [1, 1]} : vector<8x64xf32> to vector<8x32xf32>
    %229 = arith.negf %228 : vector<8x32xf32>
    %230 = math.exp %229 : vector<8x32xf32>
    %cst_38 = arith.constant 1.000000e+00 : f32
    %231 = vector.broadcast %cst_38 : f32 to vector<8x32xf32>
    %232 = arith.addf %231, %230 : vector<8x32xf32>
    %233 = arith.divf %231, %232 : vector<8x32xf32>
    %234 = vector.extract_strided_slice %217 {offsets = [0, 64], sizes = [8, 32], strides = [1, 1]} : vector<8x96xf32> to vector<8x32xf32>
    %235 = vector.extract_strided_slice %218 {offsets = [0, 64], sizes = [8, 32], strides = [1, 1]} : vector<8x96xf32> to vector<8x32xf32>
    %236 = arith.mulf %227, %235 : vector<8x32xf32>
    %237 = arith.addf %234, %236 : vector<8x32xf32>
    %238 = math.tanh %237 : vector<8x32xf32>
    %cst_39 = arith.constant 1.000000e+00 : f32
    %239 = vector.broadcast %cst_39 : f32 to vector<8x32xf32>
    %240 = arith.subf %239, %233 : vector<8x32xf32>
    %241 = arith.mulf %240, %238 : vector<8x32xf32>
    %242 = arith.mulf %233, %211 : vector<8x32xf32>
    %243 = arith.addf %241, %242 : vector<8x32xf32>
    %c5_i32 = arith.constant 5 : i32
    %244 = vector.broadcast %c5_i32 : i32 to vector<8x1xi32>
    %245 = arith.cmpi sgt, %2, %244 : vector<8x1xi32>
    %cst_40 = arith.constant 0.000000e+00 : f32
    %246 = vector.shape_cast %245 : vector<8x1xi1> to vector<8x1xi1>
    %247 = vector.broadcast %246 : vector<8x1xi1> to vector<8x32xi1>
    %248 = vector.broadcast %cst_40 : f32 to vector<8x32xf32>
    %249 = arith.select %247, %243, %248 : vector<8x32xi1>, vector<8x32xf32>
    %250 = vector.shape_cast %245 : vector<8x1xi1> to vector<8x1xi1>
    %251 = vector.broadcast %250 : vector<8x1xi1> to vector<8x32xi1>
    %252 = arith.select %251, %243, %211 : vector<8x32xi1>, vector<8x32xf32>
    %253 = vector.extract_strided_slice %1 {offsets = [0, 6], sizes = [8, 1], strides = [1, 1]} : vector<8x8xi32> to vector<8x1xi32>
    %254 = vector.broadcast %253 : vector<8x1xi32> to vector<8x50xi32>
    %255 = arith.cmpi eq, %254, %5 : vector<8x50xi32>
    %256 = arith.extui %255 : vector<8x50xi1> to vector<8x50xi32>
    %257 = arith.sitofp %256 : vector<8x50xi32> to vector<8x50xf32>
    %cst_41 = arith.constant dense<0.000000e+00> : vector<8x96xf32>
    %258 = tpu.matmul %257, %3, %cst_41 {dimension_numbers = #tpu.dot_dimension_numbers<[1], [0], [0], [1], [0, 0, 1, 1], [], []>} : vector<8x50xf32>, vector<50x96xf32>, vector<8x96xf32> -> vector<8x96xf32>
    %cst_42 = arith.constant dense<0.000000e+00> : vector<8x96xf32>
    %259 = tpu.matmul %252, %4, %cst_42 {dimension_numbers = #tpu.dot_dimension_numbers<[1], [0], [0], [1], [0, 0, 1, 1], [], []>} : vector<8x32xf32>, vector<32x96xf32>, vector<8x96xf32> -> vector<8x96xf32>
    %260 = vector.extract_strided_slice %258 {offsets = [0, 0], sizes = [8, 64], strides = [1, 1]} : vector<8x96xf32> to vector<8x64xf32>
    %261 = vector.extract_strided_slice %259 {offsets = [0, 0], sizes = [8, 64], strides = [1, 1]} : vector<8x96xf32> to vector<8x64xf32>
    %262 = arith.addf %260, %261 : vector<8x64xf32>
    %263 = vector.extract_strided_slice %262 {offsets = [0, 0], sizes = [8, 32], strides = [1, 1]} : vector<8x64xf32> to vector<8x32xf32>
    %264 = arith.negf %263 : vector<8x32xf32>
    %265 = math.exp %264 : vector<8x32xf32>
    %cst_43 = arith.constant 1.000000e+00 : f32
    %266 = vector.broadcast %cst_43 : f32 to vector<8x32xf32>
    %267 = arith.addf %266, %265 : vector<8x32xf32>
    %268 = arith.divf %266, %267 : vector<8x32xf32>
    %269 = vector.extract_strided_slice %262 {offsets = [0, 32], sizes = [8, 32], strides = [1, 1]} : vector<8x64xf32> to vector<8x32xf32>
    %270 = arith.negf %269 : vector<8x32xf32>
    %271 = math.exp %270 : vector<8x32xf32>
    %cst_44 = arith.constant 1.000000e+00 : f32
    %272 = vector.broadcast %cst_44 : f32 to vector<8x32xf32>
    %273 = arith.addf %272, %271 : vector<8x32xf32>
    %274 = arith.divf %272, %273 : vector<8x32xf32>
    %275 = vector.extract_strided_slice %258 {offsets = [0, 64], sizes = [8, 32], strides = [1, 1]} : vector<8x96xf32> to vector<8x32xf32>
    %276 = vector.extract_strided_slice %259 {offsets = [0, 64], sizes = [8, 32], strides = [1, 1]} : vector<8x96xf32> to vector<8x32xf32>
    %277 = arith.mulf %268, %276 : vector<8x32xf32>
    %278 = arith.addf %275, %277 : vector<8x32xf32>
    %279 = math.tanh %278 : vector<8x32xf32>
    %cst_45 = arith.constant 1.000000e+00 : f32
    %280 = vector.broadcast %cst_45 : f32 to vector<8x32xf32>
    %281 = arith.subf %280, %274 : vector<8x32xf32>
    %282 = arith.mulf %281, %279 : vector<8x32xf32>
    %283 = arith.mulf %274, %252 : vector<8x32xf32>
    %284 = arith.addf %282, %283 : vector<8x32xf32>
    %c6_i32 = arith.constant 6 : i32
    %285 = vector.broadcast %c6_i32 : i32 to vector<8x1xi32>
    %286 = arith.cmpi sgt, %2, %285 : vector<8x1xi32>
    %cst_46 = arith.constant 0.000000e+00 : f32
    %287 = vector.shape_cast %286 : vector<8x1xi1> to vector<8x1xi1>
    %288 = vector.broadcast %287 : vector<8x1xi1> to vector<8x32xi1>
    %289 = vector.broadcast %cst_46 : f32 to vector<8x32xf32>
    %290 = arith.select %288, %284, %289 : vector<8x32xi1>, vector<8x32xf32>
    %291 = vector.shape_cast %286 : vector<8x1xi1> to vector<8x1xi1>
    %292 = vector.broadcast %291 : vector<8x1xi1> to vector<8x32xi1>
    %293 = arith.select %292, %284, %252 : vector<8x32xi1>, vector<8x32xf32>
    %294 = vector.extract_strided_slice %1 {offsets = [0, 7], sizes = [8, 1], strides = [1, 1]} : vector<8x8xi32> to vector<8x1xi32>
    %295 = vector.broadcast %294 : vector<8x1xi32> to vector<8x50xi32>
    %296 = arith.cmpi eq, %295, %5 : vector<8x50xi32>
    %297 = arith.extui %296 : vector<8x50xi1> to vector<8x50xi32>
    %298 = arith.sitofp %297 : vector<8x50xi32> to vector<8x50xf32>
    %cst_47 = arith.constant dense<0.000000e+00> : vector<8x96xf32>
    %299 = tpu.matmul %298, %3, %cst_47 {dimension_numbers = #tpu.dot_dimension_numbers<[1], [0], [0], [1], [0, 0, 1, 1], [], []>} : vector<8x50xf32>, vector<50x96xf32>, vector<8x96xf32> -> vector<8x96xf32>
    %cst_48 = arith.constant dense<0.000000e+00> : vector<8x96xf32>
    %300 = tpu.matmul %293, %4, %cst_48 {dimension_numbers = #tpu.dot_dimension_numbers<[1], [0], [0], [1], [0, 0, 1, 1], [], []>} : vector<8x32xf32>, vector<32x96xf32>, vector<8x96xf32> -> vector<8x96xf32>
    %301 = vector.extract_strided_slice %299 {offsets = [0, 0], sizes = [8, 64], strides = [1, 1]} : vector<8x96xf32> to vector<8x64xf32>
    %302 = vector.extract_strided_slice %300 {offsets = [0, 0], sizes = [8, 64], strides = [1, 1]} : vector<8x96xf32> to vector<8x64xf32>
    %303 = arith.addf %301, %302 : vector<8x64xf32>
    %304 = vector.extract_strided_slice %303 {offsets = [0, 0], sizes = [8, 32], strides = [1, 1]} : vector<8x64xf32> to vector<8x32xf32>
    %305 = arith.negf %304 : vector<8x32xf32>
    %306 = math.exp %305 : vector<8x32xf32>
    %cst_49 = arith.constant 1.000000e+00 : f32
    %307 = vector.broadcast %cst_49 : f32 to vector<8x32xf32>
    %308 = arith.addf %307, %306 : vector<8x32xf32>
    %309 = arith.divf %307, %308 : vector<8x32xf32>
    %310 = vector.extract_strided_slice %303 {offsets = [0, 32], sizes = [8, 32], strides = [1, 1]} : vector<8x64xf32> to vector<8x32xf32>
    %311 = arith.negf %310 : vector<8x32xf32>
    %312 = math.exp %311 : vector<8x32xf32>
    %cst_50 = arith.constant 1.000000e+00 : f32
    %313 = vector.broadcast %cst_50 : f32 to vector<8x32xf32>
    %314 = arith.addf %313, %312 : vector<8x32xf32>
    %315 = arith.divf %313, %314 : vector<8x32xf32>
    %316 = vector.extract_strided_slice %299 {offsets = [0, 64], sizes = [8, 32], strides = [1, 1]} : vector<8x96xf32> to vector<8x32xf32>
    %317 = vector.extract_strided_slice %300 {offsets = [0, 64], sizes = [8, 32], strides = [1, 1]} : vector<8x96xf32> to vector<8x32xf32>
    %318 = arith.mulf %309, %317 : vector<8x32xf32>
    %319 = arith.addf %316, %318 : vector<8x32xf32>
    %320 = math.tanh %319 : vector<8x32xf32>
    %cst_51 = arith.constant 1.000000e+00 : f32
    %321 = vector.broadcast %cst_51 : f32 to vector<8x32xf32>
    %322 = arith.subf %321, %315 : vector<8x32xf32>
    %323 = arith.mulf %322, %320 : vector<8x32xf32>
    %324 = arith.mulf %315, %293 : vector<8x32xf32>
    %325 = arith.addf %323, %324 : vector<8x32xf32>
    %c7_i32 = arith.constant 7 : i32
    %326 = vector.broadcast %c7_i32 : i32 to vector<8x1xi32>
    %327 = arith.cmpi sgt, %2, %326 : vector<8x1xi32>
    %cst_52 = arith.constant 0.000000e+00 : f32
    %328 = vector.shape_cast %327 : vector<8x1xi1> to vector<8x1xi1>
    %329 = vector.broadcast %328 : vector<8x1xi1> to vector<8x32xi1>
    %330 = vector.broadcast %cst_52 : f32 to vector<8x32xf32>
    %331 = arith.select %329, %325, %330 : vector<8x32xi1>, vector<8x32xf32>
    %332 = vector.shape_cast %327 : vector<8x1xi1> to vector<8x1xi1>
    %333 = vector.broadcast %332 : vector<8x1xi1> to vector<8x32xi1>
    %334 = arith.select %333, %325, %293 : vector<8x32xi1>, vector<8x32xf32>
    %335 = tpu.concatenate %44, %85, %126, %167, %208, %249, %290, %331 in 1 : vector<8x32xf32>, vector<8x32xf32>, vector<8x32xf32>, vector<8x32xf32>, vector<8x32xf32>, vector<8x32xf32>, vector<8x32xf32>, vector<8x32xf32> -> vector<8x256xf32>
    %c0_53 = arith.constant 0 : index
    %c0_54 = arith.constant 0 : index
    %336 = vector.load %arg4[%c0_53, %c0_54] : memref<8x256xf32, #tpu.memory_space<vmem>>, vector<8x256xf32>
    tpu.vector_store %arg4[%c0_53, %c0_54], %335 {strides = array<i32>} : memref<8x256xf32, #tpu.memory_space<vmem>>, vector<8x256xf32>,
    %cst_55 = arith.constant 0.000000e+00 : f32
    %337 = vector.broadcast %cst_55 : f32 to vector<8x96xf32>
    %338 = tpu.concatenate %334, %337 in 1 : vector<8x32xf32>, vector<8x96xf32> -> vector<8x128xf32>
    %c0_56 = arith.constant 0 : index
    %c0_57 = arith.constant 0 : index
    %339 = vector.load %arg5[%c0_56, %c0_57] : memref<8x128xf32, #tpu.memory_space<vmem>>, vector<8x128xf32>
    tpu.vector_store %arg5[%c0_56, %c0_57], %338 {strides = array<i32>} : memref<8x128xf32, #tpu.memory_space<vmem>>, vector<8x128xf32>,
    return
  }
  func.func @transform_0(%arg0: i32) -> (i32, i32) {
    %c0_i32 = arith.constant 0 : i32
    %c0_i32_0 = arith.constant 0 : i32
    return %arg0, %c0_i32 : i32, i32
  }
  func.func @transform_1(%arg0: i32) -> (i32, i32) {
    %c0_i32 = arith.constant 0 : i32
    %c0_i32_0 = arith.constant 0 : i32
    %c0_i32_1 = arith.constant 0 : i32
    return %c0_i32, %c0_i32_0 : i32, i32
  }
  func.func @transform_2(%arg0: i32) -> (i32, i32) {
    %c0_i32 = arith.constant 0 : i32
    %c0_i32_0 = arith.constant 0 : i32
    %c0_i32_1 = arith.constant 0 : i32
    return %c0_i32, %c0_i32_0 : i32, i32
  }
  func.func @transform_3(%arg0: i32) -> (i32, i32) {
    %c0_i32 = arith.constant 0 : i32
    %c0_i32_0 = arith.constant 0 : i32
    return %arg0, %c0_i32 : i32, i32
  }
  func.func @transform_4(%arg0: i32) -> (i32, i32) {
    %c0_i32 = arith.constant 0 : i32
    %c0_i32_0 = arith.constant 0 : i32
    return %arg0, %c0_i32 : i32, i32
  }
}

</mosaic_0001>

<llo_original>
// kernel: tpu_custom_call.1
$region0: #{tpu_custom_call.1}
  #allocation0 [shape = 'u32[]', space=smem, size = 0x4, offset = 0x4, fixed_abs, tag = 'smem constant byte address 0x4 - core index']
  #allocation1 [shape = 'u32[144,128]{1,0:T(1,128)}', space=vmem, size = 0x12000, scoped, tag = 'internal scratch']
  %s0 = inlined_call_operand.hbm [shape: s32[16,9], index: 0, kind: input, shape index: {}]
  %s1 = inlined_call_operand.hbm [shape: f32[50,96], index: 1, kind: input, shape index: {}]
  %s2 = inlined_call_operand.hbm [shape: f32[32,96], index: 2, kind: input, shape index: {}]
  %s3 = inlined_call_operand.hbm [shape: f32[16,256], index: 3, kind: output, shape index: {0}]
  %s4 = inlined_call_operand.hbm [shape: f32[16,128], index: 4, kind: output, shape index: {1}]
  %5 = xla_tuple %s3, %s4
  %s6 = sld [smem:[#allocation0]]
  $region65: #{tpu_custom_call.1} parent=0
    _
  %s8 = ssub.s32 1, %s6
  %s9 = scalar_select 0, %s8, %s6
  $region1: #{tpu_custom_call.1} parent=0
    #allocation2 [shape = 'u8[8192]{0}', space=vmem, size = 0x2000, scoped, tag = 'input window, operand 0']
    #allocation3 [shape = 's32[2]{0}', space=sflag, size = 0x8, scoped, tag = 'scoped memory for tpu_custom_call.1']
    #allocation4 [shape = 's32[2]{0}', space=sflag, size = 0x8, scoped, tag = 'scoped memory for tpu_custom_call.1']
    #allocation5 [shape = 'u8[28672]{0}', space=vmem, size = 0x7000, scoped, tag = 'input window, operand 1, single buffered']
    #allocation6 [shape = 's32[1]{0}', space=sflag, size = 0x4, scoped, tag = 'scoped memory for tpu_custom_call.1']
    #allocation7 [shape = 'u8[16384]{0}', space=vmem, size = 0x4000, scoped, tag = 'input window, operand 2, single buffered']
    #allocation8 [shape = 'u8[16384]{0}', space=vmem, size = 0x4000, scoped, tag = 'output window, operand 0']
    #allocation9 [shape = 'u8[8192]{0}', space=vmem, size = 0x2000, scoped, tag = 'output window, operand 1']
    #allocation10 [shape = 's32[2]{0}', space=sflag, size = 0x8, scoped, tag = 'scoped memory for tpu_custom_call.1']
    %10 = vsyncpa [#allocation3], 0
    %s11 = scalar_lea.sflag [#allocation3], 1
    %12 = vsyncpa %s11, 0
    %13 = vsyncpa [#allocation6], 0
    %14 = vsyncpa [#allocation4], 0
    %s15 = scalar_lea.sflag [#allocation4], 1
    %16 = vsyncpa %s15, 0
    %17 = vsyncpa [#allocation10], 0
    %s18 = scalar_lea.sflag [#allocation10], 1
    %19 = vsyncpa %s18, 0
    loop: start=0, step=1, limit=4
    $region2: #{tpu_custom_call.1} parent=1 // loop_pre_header
      _
    $region3: #{tpu_custom_call.1} parent=1 // loop_header
      %s21 = sphi 0, %s25
      %p22 = scmp.ge.s32.totalorder %s21, 4
      %s31 = sphi 0, %s33
      %s34 = sphi 0, %s31
      %s35 = sphi 0, %s34
      %s51 = sphi 0, %s35
      %s55 = sphi 0, %s55
      %s57 = sphi 0, %s55
      %s58 = sphi 0, %s57
      %s72 = sphi 0, %s58
      %s76 = sphi 0, %s76
      %s78 = sphi 0, %s76
      %s79 = sphi 0, %s78
      %s93 = sphi 0, %s79
      %s99 = sphi 0, %s101
      %s102 = sphi 0, %s99
      %s103 = sphi 0, %s102
      %s119 = sphi 0, %s103
      %s125 = sphi 0, %s127
      %s128 = sphi 0, %s125
      %s129 = sphi 0, %s128
      %s145 = sphi 0, %s129
    $region4: #{tpu_custom_call.1} parent=1 // loop_header_branch
      %24 = sbr.rel (%p22) target = $region8
    $region5: #{tpu_custom_call.1} parent=1 // loop_body
      %s26 = ssub.s32 %s21, 1
      %s27 = ssub.s32 %s21, 2
      %s28 = sadd.s32 %s21, 1
      %s29 = ssub.s32 %s21, %s28
      %p30 = scmp.eq.s32.totalorder %s29, 0
      %s32 = sadd.s32 %s31, 1
      %s33 = scalar_select %p30, %s31, %s32
      %p36 = pneg %p30
      %p37 = scmp.eq.s32.totalorder %s21, 1
      %p38 = por %p36, %p37
      %p39 = scmp.ne.s32.totalorder %s31, %s34
      %p40 = scmp.eq.s32.totalorder %s21, 0
      %p41 = por %p39, %p40
      %p42 = scmp.ne.s32.totalorder %s31, %s34
      %p43 = scmp.eq.s32.totalorder %s26, 1
      %p44 = por %p42, %p43
      %p45 = scmp.ne.s32.totalorder %s34, %s35
      %p46 = scmp.eq.s32.totalorder %s26, 0
      %p47 = por %p45, %p46
      %p48 = scmp.ne.s32.totalorder %s34, %s35
      %p49 = scmp.eq.s32.totalorder %s27, 1
      %p50 = por %p48, %p49
      %p52 = scmp.ne.s32.totalorder %s35, %s51
      %p53 = scmp.eq.s32.totalorder %s27, 0
      %p54 = por %p52, %p53
      %s56 = sadd.s32 %s55, 1
      %p59 = scmp.eq.s32.totalorder %s21, 1
      %p60 = scmp.ne.s32.totalorder %s55, %s57
      %p61 = scmp.eq.s32.totalorder %s21, 0
      %p62 = por %p60, %p61
      %p63 = scmp.ne.s32.totalorder %s55, %s57
      %p64 = scmp.eq.s32.totalorder %s26, 1
      %p65 = por %p63, %p64
      %p66 = scmp.ne.s32.totalorder %s57, %s58
      %p67 = scmp.eq.s32.totalorder %s26, 0
      %p68 = por %p66, %p67
      %p69 = scmp.ne.s32.totalorder %s57, %s58
      %p70 = scmp.eq.s32.totalorder %s27, 1
      %p71 = por %p69, %p70
      %p73 = scmp.ne.s32.totalorder %s58, %s72
      %p74 = scmp.eq.s32.totalorder %s27, 0
      %p75 = por %p73, %p74
      %s77 = sadd.s32 %s76, 1
      %p80 = scmp.eq.s32.totalorder %s21, 1
      %p81 = scmp.ne.s32.totalorder %s76, %s78
      %p82 = scmp.eq.s32.totalorder %s21, 0
      %p83 = por %p81, %p82
      %p84 = scmp.ne.s32.totalorder %s76, %s78
      %p85 = scmp.eq.s32.totalorder %s26, 1
      %p86 = por %p84, %p85
      %p87 = scmp.ne.s32.totalorder %s78, %s79
      %p88 = scmp.eq.s32.totalorder %s26, 0
      %p89 = por %p87, %p88
      %p90 = scmp.ne.s32.totalorder %s78, %s79
      %p91 = scmp.eq.s32.totalorder %s27, 1
      %p92 = por %p90, %p91
      %p94 = scmp.ne.s32.totalorder %s79, %s93
      %p95 = scmp.eq.s32.totalorder %s27, 0
      %p96 = por %p94, %p95
      %s97 = ssub.s32 %s21, %s28
      %p98 = scmp.eq.s32.totalorder %s97, 0
      %s100 = sadd.s32 %s99, 1
      %s101 = scalar_select %p98, %s99, %s100
      %p104 = pneg %p98
      %p105 = scmp.eq.s32.totalorder %s21, 1
      %p106 = por %p104, %p105
      %p107 = scmp.ne.s32.totalorder %s99, %s102
      %p108 = scmp.eq.s32.totalorder %s21, 0
      %p109 = por %p107, %p108
      %p110 = scmp.ne.s32.totalorder %s99, %s102
      %p111 = scmp.eq.s32.totalorder %s26, 1
      %p112 = por %p110, %p111
      %p113 = scmp.ne.s32.totalorder %s102, %s103
      %p114 = scmp.eq.s32.totalorder %s26, 0
      %p115 = por %p113, %p114
      %p116 = scmp.ne.s32.totalorder %s102, %s103
      %p117 = scmp.eq.s32.totalorder %s27, 1
      %p118 = por %p116, %p117
      %p120 = scmp.ne.s32.totalorder %s103, %s119
      %p121 = scmp.eq.s32.totalorder %s27, 0
      %p122 = por %p120, %p121
      %s123 = ssub.s32 %s21, %s28
      %p124 = scmp.eq.s32.totalorder %s123, 0
      %s126 = sadd.s32 %s125, 1
      %s127 = scalar_select %p124, %s125, %s126
      %p130 = pneg %p124
      %p131 = scmp.eq.s32.totalorder %s21, 1
      %p132 = por %p130, %p131
      %p133 = scmp.ne.s32.totalorder %s125, %s128
      %p134 = scmp.eq.s32.totalorder %s21, 0
      %p135 = por %p133, %p134
      %p136 = scmp.ne.s32.totalorder %s125, %s128
      %p137 = scmp.eq.s32.totalorder %s26, 1
      %p138 = por %p136, %p137
      %p139 = scmp.ne.s32.totalorder %s128, %s129
      %p140 = scmp.eq.s32.totalorder %s26, 0
      %p141 = por %p139, %p140
      %p142 = scmp.ne.s32.totalorder %s128, %s129
      %p143 = scmp.eq.s32.totalorder %s27, 1
      %p144 = por %p142, %p143
      %p146 = scmp.ne.s32.totalorder %s129, %s145
      %p147 = scmp.eq.s32.totalorder %s27, 0
      %p148 = por %p146, %p147
      %p149 = scmp.le.s32.totalorder 1, %s21
      %p150 = scmp.lt.s32.totalorder %s21, 3
      %p151 = pnand %p149, %p150
      %p152 = pneg %p151
      // Predicated region
      $region9: #{tpu_custom_call.1} parent=5 // pred_check
        _
      $region10: #{tpu_custom_call.1} parent=5 // pred_check_branch
        %154 = sbr.rel (%p151) target = $region12
      $region11: #{tpu_custom_call.1} parent=5 // pred_region
        %s155 = ssub.s32 %s21, 1
        // Predicated region
        $region13: #{tpu_custom_call.1} parent=11 // pred_check
          %p156 = pneg %p68
        $region14: #{tpu_custom_call.1} parent=11 // pred_check_branch
          %158 = sbr.rel (%p156) target = $region16
        $region15: #{tpu_custom_call.1} parent=11 // pred_region
          %s160 = ssub.s32 896, 896
          %161 = vsyncadd [#allocation6], %s160
          %s162 = sshll.u32 [#allocation5], 4
          %s163 = int_to_ptr.vmem [resolvable:$true] %s162
          %168 = dma.hbm_to_vmem [thread:$0]  %s1, 896, %s163, [#allocation6], 128, 128, 8
        $region16: #{tpu_custom_call.1} parent=11 // pred_fallthru
          _
        // Predicated region
        $region17: #{tpu_custom_call.1} parent=11 // pred_check
          %p169 = pneg %p89
        $region18: #{tpu_custom_call.1} parent=11 // pred_check_branch
          %171 = sbr.rel (%p169) target = $region20
        $region19: #{tpu_custom_call.1} parent=11 // pred_region
          %s173 = ssub.s32 512, 512
          %174 = vsyncadd [#allocation6], %s173
          %s175 = sshll.u32 [#allocation7], 4
          %s176 = int_to_ptr.vmem [resolvable:$true] %s175
          %181 = dma.hbm_to_vmem [thread:$0]  %s2, 512, %s176, [#allocation6], 128, 128, 8
        $region20: #{tpu_custom_call.1} parent=11 // pred_fallthru
          _
      $region12: #{tpu_custom_call.1} parent=5 // pred_fallthru
        _
      %p182 = scmp.lt.s32.totalorder %s21, 2
      // Predicated region
      $region21: #{tpu_custom_call.1} parent=5 // pred_check
        %p183 = pneg %p182
      $region22: #{tpu_custom_call.1} parent=5 // pred_check_branch
        %185 = sbr.rel (%p183) target = $region24
      $region23: #{tpu_custom_call.1} parent=5 // pred_region
        // Predicated region
        $region25: #{tpu_custom_call.1} parent=23 // pred_check
          %p186 = pneg %p41
        $region26: #{tpu_custom_call.1} parent=23 // pred_check_branch
          %188 = sbr.rel (%p186) target = $region28
        $region27: #{tpu_custom_call.1} parent=23 // pred_region
          %s189 = sand.u32 %s31, 1
          %s190 = scalar_lea.sflag [#allocation3], %s189
          %s191 = sand.u32 %s31, 1
          %s192 = smul.addr %s191, 8
          %s193 = scalar_lea.vmem [#allocation2], %s192
          %s195 = ssub.s32 128, 128
          %196 = vsyncadd %s190, %s195
          %s197 = smul.addr %s21, 128
          %s198 = scalar_lea.hbm %s0, %s197
          %s200 = sshll.u32 %s193, 4
          %s201 = int_to_ptr.vmem [resolvable:$true] %s200
          %203 = dma.hbm_to_vmem [thread:$0]  %s198, 128, %s201, %s190
        $region28: #{tpu_custom_call.1} parent=23 // pred_fallthru
          _
      $region24: #{tpu_custom_call.1} parent=5 // pred_fallthru
        _
      %p204 = scmp.le.s32.totalorder 1, %s21
      %p205 = scmp.lt.s32.totalorder %s21, 3
      %p206 = pnand %p204, %p205
      %p207 = pneg %p206
      // Predicated region
      $region29: #{tpu_custom_call.1} parent=5 // pred_check
        _
      $region30: #{tpu_custom_call.1} parent=5 // pred_check_branch
        %209 = sbr.rel (%p206) target = $region32
      $region31: #{tpu_custom_call.1} parent=5 // pred_region
        %s210 = ssub.s32 %s21, 1
        %s211 = sand.u32 %s34, 1
        %s212 = scalar_lea.sflag [#allocation3], %s211
        %s213 = sand.u32 %s34, 1
        %s214 = smul.addr %s213, 8
        %s215 = scalar_lea.vmem [#allocation2], %s214
        // Predicated region
        $region33: #{tpu_custom_call.1} parent=31 // pred_check
          %p216 = pneg %p47
        $region34: #{tpu_custom_call.1} parent=31 // pred_check_branch
          %218 = sbr.rel (%p216) target = $region36
        $region35: #{tpu_custom_call.1} parent=31 // pred_region
          %219 = dma.done %s212, 128
        $region36: #{tpu_custom_call.1} parent=31 // pred_fallthru
          _
        // Predicated region
        $region37: #{tpu_custom_call.1} parent=31 // pred_check
          %p220 = pneg %p68
        $region38: #{tpu_custom_call.1} parent=31 // pred_check_branch
          %222 = sbr.rel (%p220) target = $region40
        $region39: #{tpu_custom_call.1} parent=31 // pred_region
          %223 = dma.done [#allocation6], 896
        $region40: #{tpu_custom_call.1} parent=31 // pred_fallthru
          _
        // Predicated region
        $region41: #{tpu_custom_call.1} parent=31 // pred_check
          %p224 = pneg %p89
        $region42: #{tpu_custom_call.1} parent=31 // pred_check_branch
          %226 = sbr.rel (%p224) target = $region44
        $region43: #{tpu_custom_call.1} parent=31 // pred_region
          %227 = dma.done [#allocation6], 512
        $region44: #{tpu_custom_call.1} parent=31 // pred_fallthru
          _
        %s228 = sand.u32 %s34, 1
        %s229 = scalar_lea.sflag [#allocation3], %s228
        %s230 = sand.u32 %s34, 1
        %s231 = smul.addr %s230, 8
        %s232 = scalar_lea.vmem [#allocation2], %s231
        %p233 = pneg %p47
        %p234 = pneg %p44
        %p235 = pneg %p68
        %p236 = pneg %p65
        %p237 = pneg %p89
        %p238 = pneg %p86
        %p239 = pneg %p115
        %p240 = pneg %p112
        %s241 = sand.u32 %s102, 1
        %s242 = scalar_lea.sflag [#allocation4], %s241
        %s243 = sand.u32 %s102, 1
        %s244 = smul.addr %s243, 16
        %s245 = scalar_lea.vmem [#allocation8], %s244
        %p246 = pneg %p141
        %p247 = pneg %p138
        %s248 = sand.u32 %s128, 1
        %s249 = scalar_lea.sflag [#allocation10], %s248
        %s250 = sand.u32 %s128, 1
        %s251 = smul.addr %s250, 8
        %s252 = scalar_lea.vmem [#allocation9], %s251
        %v253 = vld [vmem:[%s215] sm:$0xff]
        %v254 = vld [vmem:[#allocation5] sm:$0xff]
        %v255 = vld [vmem:[#allocation5 + $0x8] sm:$0xff]
        %v256 = vld [vmem:[#allocation5 + $0x10] sm:$0xff]
        %v257 = vld [vmem:[#allocation5 + $0x18] sm:$0xff]
        %v258 = vld [vmem:[#allocation5 + $0x20] sm:$0xff]
        %v259 = vld [vmem:[#allocation5 + $0x28] sm:$0xff]
        %v260 = vld [vmem:[#allocation5 + $0x30] sm:$0x3]
        %v261 = vld [vmem:[#allocation7] sm:$0xff]
        %v262 = vld [vmem:[#allocation7 + $0x8] sm:$0xff]
        %v263 = vld [vmem:[#allocation7 + $0x10] sm:$0xff]
        %v264 = vld [vmem:[#allocation7 + $0x18] sm:$0xff]
        %v265 = vlaneseq
        %v266 = vand.u32 %v265, 127
        %267 = vset.pattern.permute.xlu0 0
        %268 = vperm.xlu0 %267, %v253
        %v269 = vpop.permute.xlu0 %268
        %vm270 = vcmp.eq.s32.totalorder %v269, %v266
        %v271 = vsel %vm270, 1, 0
        %v272 = vcvt.s32.f32 %v271
        %vm273 = vcmask 408576
        %v275 = vsel %vm273, %v272, 0
        %vm277 = vcmask 1041408
        %v279 = vsel %vm277, %v260, 0
        %281 = vmatprep.subr.mxu0 0.0
        %282 = vmatpush1.msra.mxu0 %v254
        %283 = vmatprep.subr.mxu0 0.0
        %284 = vmatpush1.msra.mxu0 %v255
        %285 = vmatprep.subr.mxu0 0.0
        %286 = vmatpush1.msra.mxu0 %v256
        %287 = vmatprep.subr.mxu0 0.0
        %288 = vmatpush1.msra.mxu0 %v257
        %289 = vmatprep.subr.mxu0 0.0
        %290 = vmatpush1.msra.mxu0 %v258
        %291 = vmatprep.subr.mxu0 0.0
        %292 = vmatpush1.msra.mxu0 %v259
        %293 = vmatprep.subr.mxu0 0.0
        %294 = vmatpush1.msra.mxu0 %v279
        %295 = vmatprep.subr.mxu0 0.0
        %296 = vmatpush1.msra.mxu0 0.0
        %297 = vmatprep.subr.mxu0 0.0
        %298 = vmatpush1.msra.mxu0 0.0
        %299 = vmatprep.subr.mxu0 0.0
        %300 = vmatpush1.msra.mxu0 0.0
        %301 = vmatprep.subr.mxu0 0.0
        %302 = vmatpush1.msra.mxu0 0.0
        %303 = vmatprep.subr.mxu0 0.0
        %304 = vmatpush1.msra.mxu0 0.0
        %305 = vmatprep.subr.mxu0 0.0
        %306 = vmatpush1.msra.mxu0 0.0
        %307 = vmatprep.subr.mxu0 0.0
        %308 = vmatpush1.msra.mxu0 0.0
        %309 = vmatprep.subr.mxu0 0.0
        %310 = vmatpush1.msra.mxu0 0.0
        %311 = vmatprep.subr.mxu0 0.0
        %312 = vmatpush1.msra.mxu0 0.0
        %313 = vmatprep.subr.mxu0 0.0
        %314 = vmatpush1.msra.mxu0 0.0
        %315 = vmatprep.subr.mxu0 0.0
        %316 = vmatpush1.msra.mxu0 0.0
        %317 = vmatprep.subr.mxu0 0.0
        %318 = vmatpush1.msra.mxu0 0.0
        %319 = vmatprep.subr.mxu0 0.0
        %320 = vmatpush1.msra.mxu0 0.0
        %321 = vmatprep.subr.mxu0 0.0
        %322 = vmatpush1.msra.mxu0 0.0
        %323 = vmatprep.subr.mxu0 0.0
        %324 = vmatpush1.msra.mxu0 0.0
        %325 = vmatprep.subr.mxu0 0.0
        %326 = vmatpush1.msra.mxu0 0.0
        %327 = vmatprep.subr.mxu0 0.0
        %328 = vmatpush1.msra.mxu0 0.0
        %329 = vmatprep.subr.mxu0 0.0
        %330 = vmatpush1.msra.mxu0 0.0
        %331 = vmatprep.subr.mxu0 0.0
        %332 = vmatpush1.msra.mxu0 0.0
        %333 = vmatprep.subr.mxu0 0.0
        %334 = vmatpush1.msra.mxu0 0.0
        %335 = vmatprep.subr.mxu0 0.0
        %336 = vmatpush1.msra.mxu0 0.0
        %337 = vmatprep.subr.mxu0 0.0
        %338 = vmatpush1.msra.mxu0 0.0
        %339 = vmatprep.subr.mxu0 0.0
        %340 = vmatpush1.msra.mxu0 0.0
        %341 = vmatprep.subr.mxu0 0.0
        %342 = vmatpush1.msra.mxu0 0.0
        %343 = vmatprep.subr.mxu0 0.0
        %344 = vmatpush1.msra.mxu0 0.0
        %345 = vmatprep.mubr.f32.mxu0 0.0
        %346 = vmatmul.mubr.f32.gmra.mrb[0].mxu0 %v275
        %v347 = vpop.f32.mrb[0].mxu0
        %v348 = vadd.f32 0.0, %v347
        %v349 = vpop.f32.mrb[0].mxu0
        %350 = vdwg.mxu0
        %vm351 = vcmask 261120
        %v353 = vsel %vm351, 0.0, 0
        %355 = vmatprep.subr.mxu0 0.0
        %356 = vmatpush1.msra.mxu0 %v261
        %357 = vmatprep.subr.mxu0 0.0
        %358 = vmatpush1.msra.mxu0 %v262
        %359 = vmatprep.subr.mxu0 0.0
        %360 = vmatpush1.msra.mxu0 %v263
        %361 = vmatprep.subr.mxu0 0.0
        %362 = vmatpush1.msra.mxu0 %v264
        %363 = vmatprep.subr.mxu0 0.0
        %364 = vmatpush1.msra.mxu0 0.0
        %365 = vmatprep.subr.mxu0 0.0
        %366 = vmatpush1.msra.mxu0 0.0
        %367 = vmatprep.subr.mxu0 0.0
        %368 = vmatpush1.msra.mxu0 0.0
        %369 = vmatprep.subr.mxu0 0.0
        %370 = vmatpush1.msra.mxu0 0.0
        %371 = vmatprep.subr.mxu0 0.0
        %372 = vmatpush1.msra.mxu0 0.0
        %373 = vmatprep.subr.mxu0 0.0
        %374 = vmatpush1.msra.mxu0 0.0
        %375 = vmatprep.subr.mxu0 0.0
        %376 = vmatpush1.msra.mxu0 0.0
        %377 = vmatprep.subr.mxu0 0.0
        %378 = vmatpush1.msra.mxu0 0.0
        %379 = vmatprep.subr.mxu0 0.0
        %380 = vmatpush1.msra.mxu0 0.0
        %381 = vmatprep.subr.mxu0 0.0
        %382 = vmatpush1.msra.mxu0 0.0
        %383 = vmatprep.subr.mxu0 0.0
        %384 = vmatpush1.msra.mxu0 0.0
        %385 = vmatprep.subr.mxu0 0.0
        %386 = vmatpush1.msra.mxu0 0.0
        %387 = vmatprep.subr.mxu0 0.0
        %388 = vmatpush1.msra.mxu0 0.0
        %389 = vmatprep.subr.mxu0 0.0
        %390 = vmatpush1.msra.mxu0 0.0
        %391 = vmatprep.subr.mxu0 0.0
        %392 = vmatpush1.msra.mxu0 0.0
        %393 = vmatprep.subr.mxu0 0.0
        %394 = vmatpush1.msra.mxu0 0.0
        %395 = vmatprep.subr.mxu0 0.0
        %396 = vmatpush1.msra.mxu0 0.0
        %397 = vmatprep.subr.mxu0 0.0
        %398 = vmatpush1.msra.mxu0 0.0
        %399 = vmatprep.subr.mxu0 0.0
        %400 = vmatpush1.msra.mxu0 0.0
        %401 = vmatprep.subr.mxu0 0.0
        %402 = vmatpush1.msra.mxu0 0.0
        %403 = vmatprep.subr.mxu0 0.0
        %404 = vmatpush1.msra.mxu0 0.0
        %405 = vmatprep.subr.mxu0 0.0
        %406 = vmatpush1.msra.mxu0 0.0
        %407 = vmatprep.subr.mxu0 0.0
        %408 = vmatpush1.msra.mxu0 0.0
        %409 = vmatprep.subr.mxu0 0.0
        %410 = vmatpush1.msra.mxu0 0.0
        %411 = vmatprep.subr.mxu0 0.0
        %412 = vmatpush1.msra.mxu0 0.0
        %413 = vmatprep.subr.mxu0 0.0
        %414 = vmatpush1.msra.mxu0 0.0
        %415 = vmatprep.subr.mxu0 0.0
        %416 = vmatpush1.msra.mxu0 0.0
        %417 = vmatprep.subr.mxu0 0.0
        %418 = vmatpush1.msra.mxu0 0.0
        %419 = vmatprep.mubr.f32.mxu0 0.0
        %420 = vmatmul.mubr.f32.gmra.mrb[0].mxu0 %v353
        %v421 = vpop.f32.mrb[0].mxu0
        %v422 = vadd.f32 0.0, %v421
        %v423 = vpop.f32.mrb[0].mxu0
        %424 = vdwg.mxu0
        %v425 = vadd.f32 %v348, %v422
        %v426 = vxor.u32 %v425, 2147483648
        %v427 = vmul.f32 %v426, 1.442695
        %v428 = vpow.pop %v427
        %v429 = vadd.f32 %v428, 1.0
        %v430 = vrcp.pop %v429
        %v431 = vmul.f32 1.0, %v430
        %433 = vrot.lane.b32.xlu0 %v422, 64
        %v434 = vpop.permute.xlu0 %433
        %v436 = vmul.f32 %v431, %v434
        %438 = vrot.lane.b32.xlu0 %v436, 64
        %v439 = vpop.permute.xlu0 %438
        %v441 = vadd.f32 %v348, %v439
        %v442 = vtanh.pop %v441
        %v443 = vsub.f32 1.0, %v431
        %445 = vrot.lane.b32.xlu0 %v442, 96
        %v446 = vpop.permute.xlu0 %445
        %v448 = vmul.f32 %v443, %v446
        %v449 = vmul.f32 %v431, 0.0
        %v450 = vadd.f32 %v448, %v449
        %vm451 = vcmp.gt.s32.totalorder %v253, 0
        %v452 = vsel %vm451, 1, 0
        %453 = vset.pattern.permute.xlu0 8
        %454 = vperm.xlu0 %453, %v452
        %v455 = vpop.permute.xlu0 %454
        %vm456 = vcmp.eq.s32.totalorder %v455, 1
        %v457 = vsel %vm456, %v450, 0.0
        %458 = vset.pattern.permute.xlu0 1
        %459 = vperm.xlu0 %458, %v253
        %v460 = vpop.permute.xlu0 %459
        %vm461 = vcmp.eq.s32.totalorder %v460, %v266
        %v462 = vsel %vm461, 1, 0
        %v463 = vcvt.s32.f32 %v462
        %v465 = vsel %vm273, %v463, 0
        %467 = vmatprep.subr.mxu0 0.0
        %468 = vmatpush1.msra.mxu0 %v254
        %469 = vmatprep.subr.mxu0 0.0
        %470 = vmatpush1.msra.mxu0 %v255
        %471 = vmatprep.subr.mxu0 0.0
        %472 = vmatpush1.msra.mxu0 %v256
        %473 = vmatprep.subr.mxu0 0.0
        %474 = vmatpush1.msra.mxu0 %v257
        %475 = vmatprep.subr.mxu0 0.0
        %476 = vmatpush1.msra.mxu0 %v258
        %477 = vmatprep.subr.mxu0 0.0
        %478 = vmatpush1.msra.mxu0 %v259
        %479 = vmatprep.subr.mxu0 0.0
        %480 = vmatpush1.msra.mxu0 %v279
        %481 = vmatprep.subr.mxu0 0.0
        %482 = vmatpush1.msra.mxu0 0.0
        %483 = vmatprep.subr.mxu0 0.0
        %484 = vmatpush1.msra.mxu0 0.0
        %485 = vmatprep.subr.mxu0 0.0
        %486 = vmatpush1.msra.mxu0 0.0
        %487 = vmatprep.subr.mxu0 0.0
        %488 = vmatpush1.msra.mxu0 0.0
        %489 = vmatprep.subr.mxu0 0.0
        %490 = vmatpush1.msra.mxu0 0.0
        %491 = vmatprep.subr.mxu0 0.0
        %492 = vmatpush1.msra.mxu0 0.0
        %493 = vmatprep.subr.mxu0 0.0
        %494 = vmatpush1.msra.mxu0 0.0
        %495 = vmatprep.subr.mxu0 0.0
        %496 = vmatpush1.msra.mxu0 0.0
        %497 = vmatprep.subr.mxu0 0.0
        %498 = vmatpush1.msra.mxu0 0.0
        %499 = vmatprep.subr.mxu0 0.0
        %500 = vmatpush1.msra.mxu0 0.0
        %501 = vmatprep.subr.mxu0 0.0
        %502 = vmatpush1.msra.mxu0 0.0
        %503 = vmatprep.subr.mxu0 0.0
        %504 = vmatpush1.msra.mxu0 0.0
        %505 = vmatprep.subr.mxu0 0.0
        %506 = vmatpush1.msra.mxu0 0.0
        %507 = vmatprep.subr.mxu0 0.0
        %508 = vmatpush1.msra.mxu0 0.0
        %509 = vmatprep.subr.mxu0 0.0
        %510 = vmatpush1.msra.mxu0 0.0
        %511 = vmatprep.subr.mxu0 0.0
        %512 = vmatpush1.msra.mxu0 0.0
        %513 = vmatprep.subr.mxu0 0.0
        %514 = vmatpush1.msra.mxu0 0.0
        %515 = vmatprep.subr.mxu0 0.0
        %516 = vmatpush1.msra.mxu0 0.0
        %517 = vmatprep.subr.mxu0 0.0
        %518 = vmatpush1.msra.mxu0 0.0
        %519 = vmatprep.subr.mxu0 0.0
        %520 = vmatpush1.msra.mxu0 0.0
        %521 = vmatprep.subr.mxu0 0.0
        %522 = vmatpush1.msra.mxu0 0.0
        %523 = vmatprep.subr.mxu0 0.0
        %524 = vmatpush1.msra.mxu0 0.0
        %525 = vmatprep.subr.mxu0 0.0
        %526 = vmatpush1.msra.mxu0 0.0
        %527 = vmatprep.subr.mxu0 0.0
        %528 = vmatpush1.msra.mxu0 0.0
        %529 = vmatprep.subr.mxu0 0.0
        %530 = vmatpush1.msra.mxu0 0.0
        %531 = vmatprep.mubr.f32.mxu0 0.0
        %532 = vmatmul.mubr.f32.gmra.mrb[0].mxu0 %v465
        %v533 = vpop.f32.mrb[0].mxu0
        %v534 = vadd.f32 0.0, %v533
        %v535 = vpop.f32.mrb[0].mxu0
        %536 = vdwg.mxu0
        %538 = vrot.lane.b32.xlu0 %v457, 96
        %v539 = vpop.permute.xlu0 %538
        %v540 = vsel %vm351, %v539, 0
        %542 = vmatprep.subr.mxu0 0.0
        %543 = vmatpush1.msra.mxu0 %v261
        %544 = vmatprep.subr.mxu0 0.0
        %545 = vmatpush1.msra.mxu0 %v262
        %546 = vmatprep.subr.mxu0 0.0
        %547 = vmatpush1.msra.mxu0 %v263
        %548 = vmatprep.subr.mxu0 0.0
        %549 = vmatpush1.msra.mxu0 %v264
        %550 = vmatprep.subr.mxu0 0.0
        %551 = vmatpush1.msra.mxu0 0.0
        %552 = vmatprep.subr.mxu0 0.0
        %553 = vmatpush1.msra.mxu0 0.0
        %554 = vmatprep.subr.mxu0 0.0
        %555 = vmatpush1.msra.mxu0 0.0
        %556 = vmatprep.subr.mxu0 0.0
        %557 = vmatpush1.msra.mxu0 0.0
        %558 = vmatprep.subr.mxu0 0.0
        %559 = vmatpush1.msra.mxu0 0.0
        %560 = vmatprep.subr.mxu0 0.0
        %561 = vmatpush1.msra.mxu0 0.0
        %562 = vmatprep.subr.mxu0 0.0
        %563 = vmatpush1.msra.mxu0 0.0
        %564 = vmatprep.subr.mxu0 0.0
        %565 = vmatpush1.msra.mxu0 0.0
        %566 = vmatprep.subr.mxu0 0.0
        %567 = vmatpush1.msra.mxu0 0.0
        %568 = vmatprep.subr.mxu0 0.0
        %569 = vmatpush1.msra.mxu0 0.0
        %570 = vmatprep.subr.mxu0 0.0
        %571 = vmatpush1.msra.mxu0 0.0
        %572 = vmatprep.subr.mxu0 0.0
        %573 = vmatpush1.msra.mxu0 0.0
        %574 = vmatprep.subr.mxu0 0.0
        %575 = vmatpush1.msra.mxu0 0.0
        %576 = vmatprep.subr.mxu0 0.0
        %577 = vmatpush1.msra.mxu0 0.0
        %578 = vmatprep.subr.mxu0 0.0
        %579 = vmatpush1.msra.mxu0 0.0
        %580 = vmatprep.subr.mxu0 0.0
        %581 = vmatpush1.msra.mxu0 0.0
        %582 = vmatprep.subr.mxu0 0.0
        %583 = vmatpush1.msra.mxu0 0.0
        %584 = vmatprep.subr.mxu0 0.0
        %585 = vmatpush1.msra.mxu0 0.0
        %586 = vmatprep.subr.mxu0 0.0
        %587 = vmatpush1.msra.mxu0 0.0
        %588 = vmatprep.subr.mxu0 0.0
        %589 = vmatpush1.msra.mxu0 0.0
        %590 = vmatprep.subr.mxu0 0.0
        %591 = vmatpush1.msra.mxu0 0.0
        %592 = vmatprep.subr.mxu0 0.0
        %593 = vmatpush1.msra.mxu0 0.0
        %594 = vmatprep.subr.mxu0 0.0
        %595 = vmatpush1.msra.mxu0 0.0
        %596 = vmatprep.subr.mxu0 0.0
        %597 = vmatpush1.msra.mxu0 0.0
        %598 = vmatprep.subr.mxu0 0.0
        %599 = vmatpush1.msra.mxu0 0.0
        %600 = vmatprep.subr.mxu0 0.0
        %601 = vmatpush1.msra.mxu0 0.0
        %602 = vmatprep.subr.mxu0 0.0
        %603 = vmatpush1.msra.mxu0 0.0
        %604 = vmatprep.subr.mxu0 0.0
        %605 = vmatpush1.msra.mxu0 0.0
        %606 = vmatprep.mubr.f32.mxu0 0.0
        %607 = vmatmul.mubr.f32.gmra.mrb[0].mxu0 %v540
        %v608 = vpop.f32.mrb[0].mxu0
        %v609 = vadd.f32 0.0, %v608
        %v610 = vpop.f32.mrb[0].mxu0
        %611 = vdwg.mxu0
        %v612 = vadd.f32 %v534, %v609
        %v613 = vxor.u32 %v612, 2147483648
        %v614 = vmul.f32 %v613, 1.442695
        %v615 = vpow.pop %v614
        %v616 = vadd.f32 %v615, 1.0
        %v617 = vrcp.pop %v616
        %v618 = vmul.f32 1.0, %v617
        %620 = vrot.lane.b32.xlu0 %v609, 64
        %v621 = vpop.permute.xlu0 %620
        %v623 = vmul.f32 %v618, %v621
        %625 = vrot.lane.b32.xlu0 %v623, 64
        %v626 = vpop.permute.xlu0 %625
        %v628 = vadd.f32 %v534, %v626
        %v629 = vtanh.pop %v628
        %v630 = vsub.f32 1.0, %v618
        %632 = vrot.lane.b32.xlu0 %v629, 96
        %v633 = vpop.permute.xlu0 %632
        %v635 = vmul.f32 %v630, %v633
        %v636 = vmul.f32 %v618, %v457
        %v637 = vadd.f32 %v635, %v636
        %vm638 = vcmp.gt.s32.totalorder %v253, 1
        %v639 = vsel %vm638, 1, 0
        %640 = vset.pattern.permute.xlu0 8
        %641 = vperm.xlu0 %640, %v639
        %v642 = vpop.permute.xlu0 %641
        %vm643 = vcmp.eq.s32.totalorder %v642, 1
        %v644 = vsel %vm643, %v637, 0.0
        %v645 = vsel %vm643, %v637, %v457
        %646 = vset.pattern.permute.xlu0 2
        %647 = vperm.xlu0 %646, %v253
        %v648 = vpop.permute.xlu0 %647
        %vm649 = vcmp.eq.s32.totalorder %v648, %v266
        %v650 = vsel %vm649, 1, 0
        %v651 = vcvt.s32.f32 %v650
        %v653 = vsel %vm273, %v651, 0
        %655 = vmatprep.subr.mxu0 0.0
        %656 = vmatpush1.msra.mxu0 %v254
        %657 = vmatprep.subr.mxu0 0.0
        %658 = vmatpush1.msra.mxu0 %v255
        %659 = vmatprep.subr.mxu0 0.0
        %660 = vmatpush1.msra.mxu0 %v256
        %661 = vmatprep.subr.mxu0 0.0
        %662 = vmatpush1.msra.mxu0 %v257
        %663 = vmatprep.subr.mxu0 0.0
        %664 = vmatpush1.msra.mxu0 %v258
        %665 = vmatprep.subr.mxu0 0.0
        %666 = vmatpush1.msra.mxu0 %v259
        %667 = vmatprep.subr.mxu0 0.0
        %668 = vmatpush1.msra.mxu0 %v279
        %669 = vmatprep.subr.mxu0 0.0
        %670 = vmatpush1.msra.mxu0 0.0
        %671 = vmatprep.subr.mxu0 0.0
        %672 = vmatpush1.msra.mxu0 0.0
        %673 = vmatprep.subr.mxu0 0.0
        %674 = vmatpush1.msra.mxu0 0.0
        %675 = vmatprep.subr.mxu0 0.0
        %676 = vmatpush1.msra.mxu0 0.0
        %677 = vmatprep.subr.mxu0 0.0
        %678 = vmatpush1.msra.mxu0 0.0
        %679 = vmatprep.subr.mxu0 0.0
        %680 = vmatpush1.msra.mxu0 0.0
        %681 = vmatprep.subr.mxu0 0.0
        %682 = vmatpush1.msra.mxu0 0.0
        %683 = vmatprep.subr.mxu0 0.0
        %684 = vmatpush1.msra.mxu0 0.0
        %685 = vmatprep.subr.mxu0 0.0
        %686 = vmatpush1.msra.mxu0 0.0
        %687 = vmatprep.subr.mxu0 0.0
        %688 = vmatpush1.msra.mxu0 0.0
        %689 = vmatprep.subr.mxu0 0.0
        %690 = vmatpush1.msra.mxu0 0.0
        %691 = vmatprep.subr.mxu0 0.0
        %692 = vmatpush1.msra.mxu0 0.0
        %693 = vmatprep.subr.mxu0 0.0
        %694 = vmatpush1.msra.mxu0 0.0
        %695 = vmatprep.subr.mxu0 0.0
        %696 = vmatpush1.msra.mxu0 0.0
        %697 = vmatprep.subr.mxu0 0.0
        %698 = vmatpush1.msra.mxu0 0.0
        %699 = vmatprep.subr.mxu0 0.0
        %700 = vmatpush1.msra.mxu0 0.0
        %701 = vmatprep.subr.mxu0 0.0
        %702 = vmatpush1.msra.mxu0 0.0
        %703 = vmatprep.subr.mxu0 0.0
        %704 = vmatpush1.msra.mxu0 0.0
        %705 = vmatprep.subr.mxu0 0.0
        %706 = vmatpush1.msra.mxu0 0.0
        %707 = vmatprep.subr.mxu0 0.0
        %708 = vmatpush1.msra.mxu0 0.0
        %709 = vmatprep.subr.mxu0 0.0
        %710 = vmatpush1.msra.mxu0 0.0
        %711 = vmatprep.subr.mxu0 0.0
        %712 = vmatpush1.msra.mxu0 0.0
        %713 = vmatprep.subr.mxu0 0.0
        %714 = vmatpush1.msra.mxu0 0.0
        %715 = vmatprep.subr.mxu0 0.0
        %716 = vmatpush1.msra.mxu0 0.0
        %717 = vmatprep.subr.mxu0 0.0
        %718 = vmatpush1.msra.mxu0 0.0
        %719 = vmatprep.mubr.f32.mxu0 0.0
        %720 = vmatmul.mubr.f32.gmra.mrb[0].mxu0 %v653
        %v721 = vpop.f32.mrb[0].mxu0
        %v722 = vadd.f32 0.0, %v721
        %v723 = vpop.f32.mrb[0].mxu0
        %724 = vdwg.mxu0
        %726 = vrot.lane.b32.xlu0 %v645, 96
        %v727 = vpop.permute.xlu0 %726
        %v728 = vsel %vm351, %v727, 0
        %730 = vmatprep.subr.mxu0 0.0
        %731 = vmatpush1.msra.mxu0 %v261
        %732 = vmatprep.subr.mxu0 0.0
        %733 = vmatpush1.msra.mxu0 %v262
        %734 = vmatprep.subr.mxu0 0.0
        %735 = vmatpush1.msra.mxu0 %v263
        %736 = vmatprep.subr.mxu0 0.0
        %737 = vmatpush1.msra.mxu0 %v264
        %738 = vmatprep.subr.mxu0 0.0
        %739 = vmatpush1.msra.mxu0 0.0
        %740 = vmatprep.subr.mxu0 0.0
        %741 = vmatpush1.msra.mxu0 0.0
        %742 = vmatprep.subr.mxu0 0.0
        %743 = vmatpush1.msra.mxu0 0.0
        %744 = vmatprep.subr.mxu0 0.0
        %745 = vmatpush1.msra.mxu0 0.0
        %746 = vmatprep.subr.mxu0 0.0
        %747 = vmatpush1.msra.mxu0 0.0
        %748 = vmatprep.subr.mxu0 0.0
        %749 = vmatpush1.msra.mxu0 0.0
        %750 = vmatprep.subr.mxu0 0.0
        %751 = vmatpush1.msra.mxu0 0.0
        %752 = vmatprep.subr.mxu0 0.0
        %753 = vmatpush1.msra.mxu0 0.0
        %754 = vmatprep.subr.mxu0 0.0
        %755 = vmatpush1.msra.mxu0 0.0
        %756 = vmatprep.subr.mxu0 0.0
        %757 = vmatpush1.msra.mxu0 0.0
        %758 = vmatprep.subr.mxu0 0.0
        %759 = vmatpush1.msra.mxu0 0.0
        %760 = vmatprep.subr.mxu0 0.0
        %761 = vmatpush1.msra.mxu0 0.0
        %762 = vmatprep.subr.mxu0 0.0
        %763 = vmatpush1.msra.mxu0 0.0
        %764 = vmatprep.subr.mxu0 0.0
        %765 = vmatpush1.msra.mxu0 0.0
        %766 = vmatprep.subr.mxu0 0.0
        %767 = vmatpush1.msra.mxu0 0.0
        %768 = vmatprep.subr.mxu0 0.0
        %769 = vmatpush1.msra.mxu0 0.0
        %770 = vmatprep.subr.mxu0 0.0
        %771 = vmatpush1.msra.mxu0 0.0
        %772 = vmatprep.subr.mxu0 0.0
        %773 = vmatpush1.msra.mxu0 0.0
        %774 = vmatprep.subr.mxu0 0.0
        %775 = vmatpush1.msra.mxu0 0.0
        %776 = vmatprep.subr.mxu0 0.0
        %777 = vmatpush1.msra.mxu0 0.0
        %778 = vmatprep.subr.mxu0 0.0
        %779 = vmatpush1.msra.mxu0 0.0
        %780 = vmatprep.subr.mxu0 0.0
        %781 = vmatpush1.msra.mxu0 0.0
        %782 = vmatprep.subr.mxu0 0.0
        %783 = vmatpush1.msra.mxu0 0.0
        %784 = vmatprep.subr.mxu0 0.0
        %785 = vmatpush1.msra.mxu0 0.0
        %786 = vmatprep.subr.mxu0 0.0
        %787 = vmatpush1.msra.mxu0 0.0
        %788 = vmatprep.subr.mxu0 0.0
        %789 = vmatpush1.msra.mxu0 0.0
        %790 = vmatprep.subr.mxu0 0.0
        %791 = vmatpush1.msra.mxu0 0.0
        %792 = vmatprep.subr.mxu0 0.0
        %793 = vmatpush1.msra.mxu0 0.0
        %794 = vmatprep.mubr.f32.mxu0 0.0
        %795 = vmatmul.mubr.f32.gmra.mrb[0].mxu0 %v728
        %v796 = vpop.f32.mrb[0].mxu0
        %v797 = vadd.f32 0.0, %v796
        %v798 = vpop.f32.mrb[0].mxu0
        %799 = vdwg.mxu0
        %v800 = vadd.f32 %v722, %v797
        %v801 = vxor.u32 %v800, 2147483648
        %v802 = vmul.f32 %v801, 1.442695
        %v803 = vpow.pop %v802
        %v804 = vadd.f32 %v803, 1.0
        %v805 = vrcp.pop %v804
        %v806 = vmul.f32 1.0, %v805
        %808 = vrot.lane.b32.xlu0 %v797, 64
        %v809 = vpop.permute.xlu0 %808
        %v811 = vmul.f32 %v806, %v809
        %813 = vrot.lane.b32.xlu0 %v811, 64
        %v814 = vpop.permute.xlu0 %813
        %v816 = vadd.f32 %v722, %v814
        %v817 = vtanh.pop %v816
        %v818 = vsub.f32 1.0, %v806
        %820 = vrot.lane.b32.xlu0 %v817, 96
        %v821 = vpop.permute.xlu0 %820
        %v823 = vmul.f32 %v818, %v821
        %v824 = vmul.f32 %v806, %v645
        %v825 = vadd.f32 %v823, %v824
        %vm826 = vcmp.gt.s32.totalorder %v253, 2
        %v827 = vsel %vm826, 1, 0
        %828 = vset.pattern.permute.xlu0 8
        %829 = vperm.xlu0 %828, %v827
        %v830 = vpop.permute.xlu0 %829
        %vm831 = vcmp.eq.s32.totalorder %v830, 1
        %v832 = vsel %vm831, %v825, 0.0
        %v833 = vsel %vm831, %v825, %v645
        %834 = vset.pattern.permute.xlu0 3
        %835 = vperm.xlu0 %834, %v253
        %v836 = vpop.permute.xlu0 %835
        %vm837 = vcmp.eq.s32.totalorder %v836, %v266
        %v838 = vsel %vm837, 1, 0
        %v839 = vcvt.s32.f32 %v838
        %v841 = vsel %vm273, %v839, 0
        %843 = vmatprep.subr.mxu0 0.0
        %844 = vmatpush1.msra.mxu0 %v254
        %845 = vmatprep.subr.mxu0 0.0
        %846 = vmatpush1.msra.mxu0 %v255
        %847 = vmatprep.subr.mxu0 0.0
        %848 = vmatpush1.msra.mxu0 %v256
        %849 = vmatprep.subr.mxu0 0.0
        %850 = vmatpush1.msra.mxu0 %v257
        %851 = vmatprep.subr.mxu0 0.0
        %852 = vmatpush1.msra.mxu0 %v258
        %853 = vmatprep.subr.mxu0 0.0
        %854 = vmatpush1.msra.mxu0 %v259
        %855 = vmatprep.subr.mxu0 0.0
        %856 = vmatpush1.msra.mxu0 %v279
        %857 = vmatprep.subr.mxu0 0.0
        %858 = vmatpush1.msra.mxu0 0.0
        %859 = vmatprep.subr.mxu0 0.0
        %860 = vmatpush1.msra.mxu0 0.0
        %861 = vmatprep.subr.mxu0 0.0
        %862 = vmatpush1.msra.mxu0 0.0
        %863 = vmatprep.subr.mxu0 0.0
        %864 = vmatpush1.msra.mxu0 0.0
        %865 = vmatprep.subr.mxu0 0.0
        %866 = vmatpush1.msra.mxu0 0.0
        %867 = vmatprep.subr.mxu0 0.0
        %868 = vmatpush1.msra.mxu0 0.0
        %869 = vmatprep.subr.mxu0 0.0
        %870 = vmatpush1.msra.mxu0 0.0
        %871 = vmatprep.subr.mxu0 0.0
        %872 = vmatpush1.msra.mxu0 0.0
        %873 = vmatprep.subr.mxu0 0.0
        %874 = vmatpush1.msra.mxu0 0.0
        %875 = vmatprep.subr.mxu0 0.0
        %876 = vmatpush1.msra.mxu0 0.0
        %877 = vmatprep.subr.mxu0 0.0
        %878 = vmatpush1.msra.mxu0 0.0
        %879 = vmatprep.subr.mxu0 0.0
        %880 = vmatpush1.msra.mxu0 0.0
        %881 = vmatprep.subr.mxu0 0.0
        %882 = vmatpush1.msra.mxu0 0.0
        %883 = vmatprep.subr.mxu0 0.0
        %884 = vmatpush1.msra.mxu0 0.0
        %885 = vmatprep.subr.mxu0 0.0
        %886 = vmatpush1.msra.mxu0 0.0
        %887 = vmatprep.subr.mxu0 0.0
        %888 = vmatpush1.msra.mxu0 0.0
        %889 = vmatprep.subr.mxu0 0.0
        %890 = vmatpush1.msra.mxu0 0.0
        %891 = vmatprep.subr.mxu0 0.0
        %892 = vmatpush1.msra.mxu0 0.0
        %893 = vmatprep.subr.mxu0 0.0
        %894 = vmatpush1.msra.mxu0 0.0
        %895 = vmatprep.subr.mxu0 0.0
        %896 = vmatpush1.msra.mxu0 0.0
        %897 = vmatprep.subr.mxu0 0.0
        %898 = vmatpush1.msra.mxu0 0.0
        %899 = vmatprep.subr.mxu0 0.0
        %900 = vmatpush1.msra.mxu0 0.0
        %901 = vmatprep.subr.mxu0 0.0
        %902 = vmatpush1.msra.mxu0 0.0
        %903 = vmatprep.subr.mxu0 0.0
        %904 = vmatpush1.msra.mxu0 0.0
        %905 = vmatprep.subr.mxu0 0.0
        %906 = vmatpush1.msra.mxu0 0.0
        %907 = vmatprep.mubr.f32.mxu0 0.0
        %908 = vmatmul.mubr.f32.gmra.mrb[0].mxu0 %v841
        %v909 = vpop.f32.mrb[0].mxu0
        %v910 = vadd.f32 0.0, %v909
        %v911 = vpop.f32.mrb[0].mxu0
        %912 = vdwg.mxu0
        %914 = vrot.lane.b32.xlu0 %v833, 96
        %v915 = vpop.permute.xlu0 %914
        %v916 = vsel %vm351, %v915, 0
        %918 = vmatprep.subr.mxu0 0.0
        %919 = vmatpush1.msra.mxu0 %v261
        %920 = vmatprep.subr.mxu0 0.0
        %921 = vmatpush1.msra.mxu0 %v262
        %922 = vmatprep.subr.mxu0 0.0
        %923 = vmatpush1.msra.mxu0 %v263
        %924 = vmatprep.subr.mxu0 0.0
        %925 = vmatpush1.msra.mxu0 %v264
        %926 = vmatprep.subr.mxu0 0.0
        %927 = vmatpush1.msra.mxu0 0.0
        %928 = vmatprep.subr.mxu0 0.0
        %929 = vmatpush1.msra.mxu0 0.0
        %930 = vmatprep.subr.mxu0 0.0
        %931 = vmatpush1.msra.mxu0 0.0
        %932 = vmatprep.subr.mxu0 0.0
        %933 = vmatpush1.msra.mxu0 0.0
        %934 = vmatprep.subr.mxu0 0.0
        %935 = vmatpush1.msra.mxu0 0.0
        %936 = vmatprep.subr.mxu0 0.0
        %937 = vmatpush1.msra.mxu0 0.0
        %938 = vmatprep.subr.mxu0 0.0
        %939 = vmatpush1.msra.mxu0 0.0
        %940 = vmatprep.subr.mxu0 0.0
        %941 = vmatpush1.msra.mxu0 0.0
        %942 = vmatprep.subr.mxu0 0.0
        %943 = vmatpush1.msra.mxu0 0.0
        %944 = vmatprep.subr.mxu0 0.0
        %945 = vmatpush1.msra.mxu0 0.0
        %946 = vmatprep.subr.mxu0 0.0
        %947 = vmatpush1.msra.mxu0 0.0
        %948 = vmatprep.subr.mxu0 0.0
        %949 = vmatpush1.msra.mxu0 0.0
        %950 = vmatprep.subr.mxu0 0.0
        %951 = vmatpush1.msra.mxu0 0.0
        %952 = vmatprep.subr.mxu0 0.0
        %953 = vmatpush1.msra.mxu0 0.0
        %954 = vmatprep.subr.mxu0 0.0
        %955 = vmatpush1.msra.mxu0 0.0
        %956 = vmatprep.subr.mxu0 0.0
        %957 = vmatpush1.msra.mxu0 0.0
        %958 = vmatprep.subr.mxu0 0.0
        %959 = vmatpush1.msra.mxu0 0.0
        %960 = vmatprep.subr.mxu0 0.0
        %961 = vmatpush1.msra.mxu0 0.0
        %962 = vmatprep.subr.mxu0 0.0
        %963 = vmatpush1.msra.mxu0 0.0
        %964 = vmatprep.subr.mxu0 0.0
        %965 = vmatpush1.msra.mxu0 0.0
        %966 = vmatprep.subr.mxu0 0.0
        %967 = vmatpush1.msra.mxu0 0.0
        %968 = vmatprep.subr.mxu0 0.0
        %969 = vmatpush1.msra.mxu0 0.0
        %970 = vmatprep.subr.mxu0 0.0
        %971 = vmatpush1.msra.mxu0 0.0
        %972 = vmatprep.subr.mxu0 0.0
        %973 = vmatpush1.msra.mxu0 0.0
        %974 = vmatprep.subr.mxu0 0.0
        %975 = vmatpush1.msra.mxu0 0.0
        %976 = vmatprep.subr.mxu0 0.0
        %977 = vmatpush1.msra.mxu0 0.0
        %978 = vmatprep.subr.mxu0 0.0
        %979 = vmatpush1.msra.mxu0 0.0
        %980 = vmatprep.subr.mxu0 0.0
        %981 = vmatpush1.msra.mxu0 0.0
        %982 = vmatprep.mubr.f32.mxu0 0.0
        %983 = vmatmul.mubr.f32.gmra.mrb[0].mxu0 %v916
        %v984 = vpop.f32.mrb[0].mxu0
        %v985 = vadd.f32 0.0, %v984
        %v986 = vpop.f32.mrb[0].mxu0
        %987 = vdwg.mxu0
        %v988 = vadd.f32 %v910, %v985
        %v989 = vxor.u32 %v988, 2147483648
        %v990 = vmul.f32 %v989, 1.442695
        %v991 = vpow.pop %v990
        %v992 = vadd.f32 %v991, 1.0
        %v993 = vrcp.pop %v992
        %v994 = vmul.f32 1.0, %v993
        %996 = vrot.lane.b32.xlu0 %v985, 64
        %v997 = vpop.permute.xlu0 %996
        %v999 = vmul.f32 %v994, %v997
        %1001 = vrot.lane.b32.xlu0 %v999, 64
        %v1002 = vpop.permute.xlu0 %1001
        %v1004 = vadd.f32 %v910, %v1002
        %v1005 = vtanh.pop %v1004
        %v1006 = vsub.f32 1.0, %v994
        %1008 = vrot.lane.b32.xlu0 %v1005, 96
        %v1009 = vpop.permute.xlu0 %1008
        %v1011 = vmul.f32 %v1006, %v1009
        %v1012 = vmul.f32 %v994, %v833
        %v1013 = vadd.f32 %v1011, %v1012
        %vm1014 = vcmp.gt.s32.totalorder %v253, 3
        %v1015 = vsel %vm1014, 1, 0
        %1016 = vset.pattern.permute.xlu0 8
        %1017 = vperm.xlu0 %1016, %v1015
        %v1018 = vpop.permute.xlu0 %1017
        %vm1019 = vcmp.eq.s32.totalorder %v1018, 1
        %v1020 = vsel %vm1019, %v1013, 0.0
        %v1021 = vsel %vm1019, %v1013, %v833
        %1022 = vset.pattern.permute.xlu0 4
        %1023 = vperm.xlu0 %1022, %v253
        %v1024 = vpop.permute.xlu0 %1023
        %vm1025 = vcmp.eq.s32.totalorder %v1024, %v266
        %v1026 = vsel %vm1025, 1, 0
        %v1027 = vcvt.s32.f32 %v1026
        %v1029 = vsel %vm273, %v1027, 0
        %1031 = vmatprep.subr.mxu0 0.0
        %1032 = vmatpush1.msra.mxu0 %v254
        %1033 = vmatprep.subr.mxu0 0.0
        %1034 = vmatpush1.msra.mxu0 %v255
        %1035 = vmatprep.subr.mxu0 0.0
        %1036 = vmatpush1.msra.mxu0 %v256
        %1037 = vmatprep.subr.mxu0 0.0
        %1038 = vmatpush1.msra.mxu0 %v257
        %1039 = vmatprep.subr.mxu0 0.0
        %1040 = vmatpush1.msra.mxu0 %v258
        %1041 = vmatprep.subr.mxu0 0.0
        %1042 = vmatpush1.msra.mxu0 %v259
        %1043 = vmatprep.subr.mxu0 0.0
        %1044 = vmatpush1.msra.mxu0 %v279
        %1045 = vmatprep.subr.mxu0 0.0
        %1046 = vmatpush1.msra.mxu0 0.0
        %1047 = vmatprep.subr.mxu0 0.0
        %1048 = vmatpush1.msra.mxu0 0.0
        %1049 = vmatprep.subr.mxu0 0.0
        %1050 = vmatpush1.msra.mxu0 0.0
        %1051 = vmatprep.subr.mxu0 0.0
        %1052 = vmatpush1.msra.mxu0 0.0
        %1053 = vmatprep.subr.mxu0 0.0
        %1054 = vmatpush1.msra.mxu0 0.0
        %1055 = vmatprep.subr.mxu0 0.0
        %1056 = vmatpush1.msra.mxu0 0.0
        %1057 = vmatprep.subr.mxu0 0.0
        %1058 = vmatpush1.msra.mxu0 0.0
        %1059 = vmatprep.subr.mxu0 0.0
        %1060 = vmatpush1.msra.mxu0 0.0
        %1061 = vmatprep.subr.mxu0 0.0
        %1062 = vmatpush1.msra.mxu0 0.0
        %1063 = vmatprep.subr.mxu0 0.0
        %1064 = vmatpush1.msra.mxu0 0.0
        %1065 = vmatprep.subr.mxu0 0.0
        %1066 = vmatpush1.msra.mxu0 0.0
        %1067 = vmatprep.subr.mxu0 0.0
        %1068 = vmatpush1.msra.mxu0 0.0
        %1069 = vmatprep.subr.mxu0 0.0
        %1070 = vmatpush1.msra.mxu0 0.0
        %1071 = vmatprep.subr.mxu0 0.0
        %1072 = vmatpush1.msra.mxu0 0.0
        %1073 = vmatprep.subr.mxu0 0.0
        %1074 = vmatpush1.msra.mxu0 0.0
        %1075 = vmatprep.subr.mxu0 0.0
        %1076 = vmatpush1.msra.mxu0 0.0
        %1077 = vmatprep.subr.mxu0 0.0
        %1078 = vmatpush1.msra.mxu0 0.0
        %1079 = vmatprep.subr.mxu0 0.0
        %1080 = vmatpush1.msra.mxu0 0.0
        %1081 = vmatprep.subr.mxu0 0.0
        %1082 = vmatpush1.msra.mxu0 0.0
        %1083 = vmatprep.subr.mxu0 0.0
        %1084 = vmatpush1.msra.mxu0 0.0
        %1085 = vmatprep.subr.mxu0 0.0
        %1086 = vmatpush1.msra.mxu0 0.0
        %1087 = vmatprep.subr.mxu0 0.0
        %1088 = vmatpush1.msra.mxu0 0.0
        %1089 = vmatprep.subr.mxu0 0.0
        %1090 = vmatpush1.msra.mxu0 0.0
        %1091 = vmatprep.subr.mxu0 0.0
        %1092 = vmatpush1.msra.mxu0 0.0
        %1093 = vmatprep.subr.mxu0 0.0
        %1094 = vmatpush1.msra.mxu0 0.0
        %1095 = vmatprep.mubr.f32.mxu0 0.0
        %1096 = vmatmul.mubr.f32.gmra.mrb[0].mxu0 %v1029
        %v1097 = vpop.f32.mrb[0].mxu0
        %v1098 = vadd.f32 0.0, %v1097
        %v1099 = vpop.f32.mrb[0].mxu0
        %1100 = vdwg.mxu0
        %1102 = vrot.lane.b32.xlu0 %v1021, 96
        %v1103 = vpop.permute.xlu0 %1102
        %v1104 = vsel %vm351, %v1103, 0
        %1106 = vmatprep.subr.mxu0 0.0
        %1107 = vmatpush1.msra.mxu0 %v261
        %1108 = vmatprep.subr.mxu0 0.0
        %1109 = vmatpush1.msra.mxu0 %v262
        %1110 = vmatprep.subr.mxu0 0.0
        %1111 = vmatpush1.msra.mxu0 %v263
        %1112 = vmatprep.subr.mxu0 0.0
        %1113 = vmatpush1.msra.mxu0 %v264
        %1114 = vmatprep.subr.mxu0 0.0
        %1115 = vmatpush1.msra.mxu0 0.0
        %1116 = vmatprep.subr.mxu0 0.0
        %1117 = vmatpush1.msra.mxu0 0.0
        %1118 = vmatprep.subr.mxu0 0.0
        %1119 = vmatpush1.msra.mxu0 0.0
        %1120 = vmatprep.subr.mxu0 0.0
        %1121 = vmatpush1.msra.mxu0 0.0
        %1122 = vmatprep.subr.mxu0 0.0
        %1123 = vmatpush1.msra.mxu0 0.0
        %1124 = vmatprep.subr.mxu0 0.0
        %1125 = vmatpush1.msra.mxu0 0.0
        %1126 = vmatprep.subr.mxu0 0.0
        %1127 = vmatpush1.msra.mxu0 0.0
        %1128 = vmatprep.subr.mxu0 0.0
        %1129 = vmatpush1.msra.mxu0 0.0
        %1130 = vmatprep.subr.mxu0 0.0
        %1131 = vmatpush1.msra.mxu0 0.0
        %1132 = vmatprep.subr.mxu0 0.0
        %1133 = vmatpush1.msra.mxu0 0.0
        %1134 = vmatprep.subr.mxu0 0.0
        %1135 = vmatpush1.msra.mxu0 0.0
        %1136 = vmatprep.subr.mxu0 0.0
        %1137 = vmatpush1.msra.mxu0 0.0
        %1138 = vmatprep.subr.mxu0 0.0
        %1139 = vmatpush1.msra.mxu0 0.0
        %1140 = vmatprep.subr.mxu0 0.0
        %1141 = vmatpush1.msra.mxu0 0.0
        %1142 = vmatprep.subr.mxu0 0.0
        %1143 = vmatpush1.msra.mxu0 0.0
        %1144 = vmatprep.subr.mxu0 0.0
        %1145 = vmatpush1.msra.mxu0 0.0
        %1146 = vmatprep.subr.mxu0 0.0
        %1147 = vmatpush1.msra.mxu0 0.0
        %1148 = vmatprep.subr.mxu0 0.0
        %1149 = vmatpush1.msra.mxu0 0.0
        %1150 = vmatprep.subr.mxu0 0.0
        %1151 = vmatpush1.msra.mxu0 0.0
        %1152 = vmatprep.subr.mxu0 0.0
        %1153 = vmatpush1.msra.mxu0 0.0
        %1154 = vmatprep.subr.mxu0 0.0
        %1155 = vmatpush1.msra.mxu0 0.0
        %1156 = vmatprep.subr.mxu0 0.0
        %1157 = vmatpush1.msra.mxu0 0.0
        %1158 = vmatprep.subr.mxu0 0.0
        %1159 = vmatpush1.msra.mxu0 0.0
        %1160 = vmatprep.subr.mxu0 0.0
        %1161 = vmatpush1.msra.mxu0 0.0
        %1162 = vmatprep.subr.mxu0 0.0
        %1163 = vmatpush1.msra.mxu0 0.0
        %1164 = vmatprep.subr.mxu0 0.0
        %1165 = vmatpush1.msra.mxu0 0.0
        %1166 = vmatprep.subr.mxu0 0.0
        %1167 = vmatpush1.msra.mxu0 0.0
        %1168 = vmatprep.subr.mxu0 0.0
        %1169 = vmatpush1.msra.mxu0 0.0
        %1170 = vmatprep.mubr.f32.mxu0 0.0
        %1171 = vmatmul.mubr.f32.gmra.mrb[0].mxu0 %v1104
        %v1172 = vpop.f32.mrb[0].mxu0
        %v1173 = vadd.f32 0.0, %v1172
        %v1174 = vpop.f32.mrb[0].mxu0
        %1175 = vdwg.mxu0
        %v1176 = vadd.f32 %v1098, %v1173
        %v1177 = vxor.u32 %v1176, 2147483648
        %v1178 = vmul.f32 %v1177, 1.442695
        %v1179 = vpow.pop %v1178
        %v1180 = vadd.f32 %v1179, 1.0
        %v1181 = vrcp.pop %v1180
        %v1182 = vmul.f32 1.0, %v1181
        %1184 = vrot.lane.b32.xlu0 %v1173, 64
        %v1185 = vpop.permute.xlu0 %1184
        %v1187 = vmul.f32 %v1182, %v1185
        %1189 = vrot.lane.b32.xlu0 %v1187, 64
        %v1190 = vpop.permute.xlu0 %1189
        %v1192 = vadd.f32 %v1098, %v1190
        %v1193 = vtanh.pop %v1192
        %v1194 = vsub.f32 1.0, %v1182
        %1196 = vrot.lane.b32.xlu0 %v1193, 96
        %v1197 = vpop.permute.xlu0 %1196
        %v1199 = vmul.f32 %v1194, %v1197
        %v1200 = vmul.f32 %v1182, %v1021
        %v1201 = vadd.f32 %v1199, %v1200
        %vm1202 = vcmp.gt.s32.totalorder %v253, 4
        %v1203 = vsel %vm1202, 1, 0
        %1204 = vset.pattern.permute.xlu0 8
        %1205 = vperm.xlu0 %1204, %v1203
        %v1206 = vpop.permute.xlu0 %1205
        %vm1207 = vcmp.eq.s32.totalorder %v1206, 1
        %v1208 = vsel %vm1207, %v1201, 0.0
        %v1209 = vsel %vm1207, %v1201, %v1021
        %1210 = vset.pattern.permute.xlu0 5
        %1211 = vperm.xlu0 %1210, %v253
        %v1212 = vpop.permute.xlu0 %1211
        %vm1213 = vcmp.eq.s32.totalorder %v1212, %v266
        %v1214 = vsel %vm1213, 1, 0
        %v1215 = vcvt.s32.f32 %v1214
        %v1217 = vsel %vm273, %v1215, 0
        %1219 = vmatprep.subr.mxu0 0.0
        %1220 = vmatpush1.msra.mxu0 %v254
        %1221 = vmatprep.subr.mxu0 0.0
        %1222 = vmatpush1.msra.mxu0 %v255
        %1223 = vmatprep.subr.mxu0 0.0
        %1224 = vmatpush1.msra.mxu0 %v256
        %1225 = vmatprep.subr.mxu0 0.0
        %1226 = vmatpush1.msra.mxu0 %v257
        %1227 = vmatprep.subr.mxu0 0.0
        %1228 = vmatpush1.msra.mxu0 %v258
        %1229 = vmatprep.subr.mxu0 0.0
        %1230 = vmatpush1.msra.mxu0 %v259
        %1231 = vmatprep.subr.mxu0 0.0
        %1232 = vmatpush1.msra.mxu0 %v279
        %1233 = vmatprep.subr.mxu0 0.0
        %1234 = vmatpush1.msra.mxu0 0.0
        %1235 = vmatprep.subr.mxu0 0.0
        %1236 = vmatpush1.msra.mxu0 0.0
        %1237 = vmatprep.subr.mxu0 0.0
        %1238 = vmatpush1.msra.mxu0 0.0
        %1239 = vmatprep.subr.mxu0 0.0
        %1240 = vmatpush1.msra.mxu0 0.0
        %1241 = vmatprep.subr.mxu0 0.0
        %1242 = vmatpush1.msra.mxu0 0.0
        %1243 = vmatprep.subr.mxu0 0.0
        %1244 = vmatpush1.msra.mxu0 0.0
        %1245 = vmatprep.subr.mxu0 0.0
        %1246 = vmatpush1.msra.mxu0 0.0
        %1247 = vmatprep.subr.mxu0 0.0
        %1248 = vmatpush1.msra.mxu0 0.0
        %1249 = vmatprep.subr.mxu0 0.0
        %1250 = vmatpush1.msra.mxu0 0.0
        %1251 = vmatprep.subr.mxu0 0.0
        %1252 = vmatpush1.msra.mxu0 0.0
        %1253 = vmatprep.subr.mxu0 0.0
        %1254 = vmatpush1.msra.mxu0 0.0
        %1255 = vmatprep.subr.mxu0 0.0
        %1256 = vmatpush1.msra.mxu0 0.0
        %1257 = vmatprep.subr.mxu0 0.0
        %1258 = vmatpush1.msra.mxu0 0.0
        %1259 = vmatprep.subr.mxu0 0.0
        %1260 = vmatpush1.msra.mxu0 0.0
        %1261 = vmatprep.subr.mxu0 0.0
        %1262 = vmatpush1.msra.mxu0 0.0
        %1263 = vmatprep.subr.mxu0 0.0
        %1264 = vmatpush1.msra.mxu0 0.0
        %1265 = vmatprep.subr.mxu0 0.0
        %1266 = vmatpush1.msra.mxu0 0.0
        %1267 = vmatprep.subr.mxu0 0.0
        %1268 = vmatpush1.msra.mxu0 0.0
        %1269 = vmatprep.subr.mxu0 0.0
        %1270 = vmatpush1.msra.mxu0 0.0
        %1271 = vmatprep.subr.mxu0 0.0
        %1272 = vmatpush1.msra.mxu0 0.0
        %1273 = vmatprep.subr.mxu0 0.0
        %1274 = vmatpush1.msra.mxu0 0.0
        %1275 = vmatprep.subr.mxu0 0.0
        %1276 = vmatpush1.msra.mxu0 0.0
        %1277 = vmatprep.subr.mxu0 0.0
        %1278 = vmatpush1.msra.mxu0 0.0
        %1279 = vmatprep.subr.mxu0 0.0
        %1280 = vmatpush1.msra.mxu0 0.0
        %1281 = vmatprep.subr.mxu0 0.0
        %1282 = vmatpush1.msra.mxu0 0.0
        %1283 = vmatprep.mubr.f32.mxu0 0.0
        %1284 = vmatmul.mubr.f32.gmra.mrb[0].mxu0 %v1217
        %v1285 = vpop.f32.mrb[0].mxu0
        %v1286 = vadd.f32 0.0, %v1285
        %v1287 = vpop.f32.mrb[0].mxu0
        %1288 = vdwg.mxu0
        %1290 = vrot.lane.b32.xlu0 %v1209, 96
        %v1291 = vpop.permute.xlu0 %1290
        %v1292 = vsel %vm351, %v1291, 0
        %1294 = vmatprep.subr.mxu0 0.0
        %1295 = vmatpush1.msra.mxu0 %v261
        %1296 = vmatprep.subr.mxu0 0.0
        %1297 = vmatpush1.msra.mxu0 %v262
        %1298 = vmatprep.subr.mxu0 0.0
        %1299 = vmatpush1.msra.mxu0 %v263
        %1300 = vmatprep.subr.mxu0 0.0
        %1301 = vmatpush1.msra.mxu0 %v264
        %1302 = vmatprep.subr.mxu0 0.0
        %1303 = vmatpush1.msra.mxu0 0.0
        %1304 = vmatprep.subr.mxu0 0.0
        %1305 = vmatpush1.msra.mxu0 0.0
        %1306 = vmatprep.subr.mxu0 0.0
        %1307 = vmatpush1.msra.mxu0 0.0
        %1308 = vmatprep.subr.mxu0 0.0
        %1309 = vmatpush1.msra.mxu0 0.0
        %1310 = vmatprep.subr.mxu0 0.0
        %1311 = vmatpush1.msra.mxu0 0.0
        %1312 = vmatprep.subr.mxu0 0.0
        %1313 = vmatpush1.msra.mxu0 0.0
        %1314 = vmatprep.subr.mxu0 0.0
        %1315 = vmatpush1.msra.mxu0 0.0
        %1316 = vmatprep.subr.mxu0 0.0
        %1317 = vmatpush1.msra.mxu0 0.0
        %1318 = vmatprep.subr.mxu0 0.0
        %1319 = vmatpush1.msra.mxu0 0.0
        %1320 = vmatprep.subr.mxu0 0.0
        %1321 = vmatpush1.msra.mxu0 0.0
        %1322 = vmatprep.subr.mxu0 0.0
        %1323 = vmatpush1.msra.mxu0 0.0
        %1324 = vmatprep.subr.mxu0 0.0
        %1325 = vmatpush1.msra.mxu0 0.0
        %1326 = vmatprep.subr.mxu0 0.0
        %1327 = vmatpush1.msra.mxu0 0.0
        %1328 = vmatprep.subr.mxu0 0.0
        %1329 = vmatpush1.msra.mxu0 0.0
        %1330 = vmatprep.subr.mxu0 0.0
        %1331 = vmatpush1.msra.mxu0 0.0
        %1332 = vmatprep.subr.mxu0 0.0
        %1333 = vmatpush1.msra.mxu0 0.0
        %1334 = vmatprep.subr.mxu0 0.0
        %1335 = vmatpush1.msra.mxu0 0.0
        %1336 = vmatprep.subr.mxu0 0.0
        %1337 = vmatpush1.msra.mxu0 0.0
        %1338 = vmatprep.subr.mxu0 0.0
        %1339 = vmatpush1.msra.mxu0 0.0
        %1340 = vmatprep.subr.mxu0 0.0
        %1341 = vmatpush1.msra.mxu0 0.0
        %1342 = vmatprep.subr.mxu0 0.0
        %1343 = vmatpush1.msra.mxu0 0.0
        %1344 = vmatprep.subr.mxu0 0.0
        %1345 = vmatpush1.msra.mxu0 0.0
        %1346 = vmatprep.subr.mxu0 0.0
        %1347 = vmatpush1.msra.mxu0 0.0
        %1348 = vmatprep.subr.mxu0 0.0
        %1349 = vmatpush1.msra.mxu0 0.0
        %1350 = vmatprep.subr.mxu0 0.0
        %1351 = vmatpush1.msra.mxu0 0.0
        %1352 = vmatprep.subr.mxu0 0.0
        %1353 = vmatpush1.msra.mxu0 0.0
        %1354 = vmatprep.subr.mxu0 0.0
        %1355 = vmatpush1.msra.mxu0 0.0
        %1356 = vmatprep.subr.mxu0 0.0
        %1357 = vmatpush1.msra.mxu0 0.0
        %1358 = vmatprep.mubr.f32.mxu0 0.0
        %1359 = vmatmul.mubr.f32.gmra.mrb[0].mxu0 %v1292
        %v1360 = vpop.f32.mrb[0].mxu0
        %v1361 = vadd.f32 0.0, %v1360
        %v1362 = vpop.f32.mrb[0].mxu0
        %1363 = vdwg.mxu0
        %v1364 = vadd.f32 %v1286, %v1361
        %v1365 = vxor.u32 %v1364, 2147483648
        %v1366 = vmul.f32 %v1365, 1.442695
        %v1367 = vpow.pop %v1366
        %v1368 = vadd.f32 %v1367, 1.0
        %v1369 = vrcp.pop %v1368
        %v1370 = vmul.f32 1.0, %v1369
        %1372 = vrot.lane.b32.xlu0 %v1361, 64
        %v1373 = vpop.permute.xlu0 %1372
        %v1375 = vmul.f32 %v1370, %v1373
        %1377 = vrot.lane.b32.xlu0 %v1375, 64
        %v1378 = vpop.permute.xlu0 %1377
        %v1380 = vadd.f32 %v1286, %v1378
        %v1381 = vtanh.pop %v1380
        %v1382 = vsub.f32 1.0, %v1370
        %1384 = vrot.lane.b32.xlu0 %v1381, 96
        %v1385 = vpop.permute.xlu0 %1384
        %v1387 = vmul.f32 %v1382, %v1385
        %v1388 = vmul.f32 %v1370, %v1209
        %v1389 = vadd.f32 %v1387, %v1388
        %vm1390 = vcmp.gt.s32.totalorder %v253, 5
        %v1391 = vsel %vm1390, 1, 0
        %1392 = vset.pattern.permute.xlu0 8
        %1393 = vperm.xlu0 %1392, %v1391
        %v1394 = vpop.permute.xlu0 %1393
        %vm1395 = vcmp.eq.s32.totalorder %v1394, 1
        %v1396 = vsel %vm1395, %v1389, 0.0
        %v1397 = vsel %vm1395, %v1389, %v1209
        %1398 = vset.pattern.permute.xlu0 6
        %1399 = vperm.xlu0 %1398, %v253
        %v1400 = vpop.permute.xlu0 %1399
        %vm1401 = vcmp.eq.s32.totalorder %v1400, %v266
        %v1402 = vsel %vm1401, 1, 0
        %v1403 = vcvt.s32.f32 %v1402
        %v1405 = vsel %vm273, %v1403, 0
        %1407 = vmatprep.subr.mxu0 0.0
        %1408 = vmatpush1.msra.mxu0 %v254
        %1409 = vmatprep.subr.mxu0 0.0
        %1410 = vmatpush1.msra.mxu0 %v255
        %1411 = vmatprep.subr.mxu0 0.0
        %1412 = vmatpush1.msra.mxu0 %v256
        %1413 = vmatprep.subr.mxu0 0.0
        %1414 = vmatpush1.msra.mxu0 %v257
        %1415 = vmatprep.subr.mxu0 0.0
        %1416 = vmatpush1.msra.mxu0 %v258
        %1417 = vmatprep.subr.mxu0 0.0
        %1418 = vmatpush1.msra.mxu0 %v259
        %1419 = vmatprep.subr.mxu0 0.0
        %1420 = vmatpush1.msra.mxu0 %v279
        %1421 = vmatprep.subr.mxu0 0.0
        %1422 = vmatpush1.msra.mxu0 0.0
        %1423 = vmatprep.subr.mxu0 0.0
        %1424 = vmatpush1.msra.mxu0 0.0
        %1425 = vmatprep.subr.mxu0 0.0
        %1426 = vmatpush1.msra.mxu0 0.0
        %1427 = vmatprep.subr.mxu0 0.0
        %1428 = vmatpush1.msra.mxu0 0.0
        %1429 = vmatprep.subr.mxu0 0.0
        %1430 = vmatpush1.msra.mxu0 0.0
        %1431 = vmatprep.subr.mxu0 0.0
        %1432 = vmatpush1.msra.mxu0 0.0
        %1433 = vmatprep.subr.mxu0 0.0
        %1434 = vmatpush1.msra.mxu0 0.0
        %1435 = vmatprep.subr.mxu0 0.0
        %1436 = vmatpush1.msra.mxu0 0.0
        %1437 = vmatprep.subr.mxu0 0.0
        %1438 = vmatpush1.msra.mxu0 0.0
        %1439 = vmatprep.subr.mxu0 0.0
        %1440 = vmatpush1.msra.mxu0 0.0
        %1441 = vmatprep.subr.mxu0 0.0
        %1442 = vmatpush1.msra.mxu0 0.0
        %1443 = vmatprep.subr.mxu0 0.0
        %1444 = vmatpush1.msra.mxu0 0.0
        %1445 = vmatprep.subr.mxu0 0.0
        %1446 = vmatpush1.msra.mxu0 0.0
        %1447 = vmatprep.subr.mxu0 0.0
        %1448 = vmatpush1.msra.mxu0 0.0
        %1449 = vmatprep.subr.mxu0 0.0
        %1450 = vmatpush1.msra.mxu0 0.0
        %1451 = vmatprep.subr.mxu0 0.0
        %1452 = vmatpush1.msra.mxu0 0.0
        %1453 = vmatprep.subr.mxu0 0.0
        %1454 = vmatpush1.msra.mxu0 0.0
        %1455 = vmatprep.subr.mxu0 0.0
        %1456 = vmatpush1.msra.mxu0 0.0
        %1457 = vmatprep.subr.mxu0 0.0
        %1458 = vmatpush1.msra.mxu0 0.0
        %1459 = vmatprep.subr.mxu0 0.0
        %1460 = vmatpush1.msra.mxu0 0.0
        %1461 = vmatprep.subr.mxu0 0.0
        %1462 = vmatpush1.msra.mxu0 0.0
        %1463 = vmatprep.subr.mxu0 0.0
        %1464 = vmatpush1.msra.mxu0 0.0
        %1465 = vmatprep.subr.mxu0 0.0
        %1466 = vmatpush1.msra.mxu0 0.0
        %1467 = vmatprep.subr.mxu0 0.0
        %1468 = vmatpush1.msra.mxu0 0.0
        %1469 = vmatprep.subr.mxu0 0.0
        %1470 = vmatpush1.msra.mxu0 0.0
        %1471 = vmatprep.mubr.f32.mxu0 0.0
        %1472 = vmatmul.mubr.f32.gmra.mrb[0].mxu0 %v1405
        %v1473 = vpop.f32.mrb[0].mxu0
        %v1474 = vadd.f32 0.0, %v1473
        %v1475 = vpop.f32.mrb[0].mxu0
        %1476 = vdwg.mxu0
        %1478 = vrot.lane.b32.xlu0 %v1397, 96
        %v1479 = vpop.permute.xlu0 %1478
        %v1480 = vsel %vm351, %v1479, 0
        %1482 = vmatprep.subr.mxu0 0.0
        %1483 = vmatpush1.msra.mxu0 %v261
        %1484 = vmatprep.subr.mxu0 0.0
        %1485 = vmatpush1.msra.mxu0 %v262
        %1486 = vmatprep.subr.mxu0 0.0
        %1487 = vmatpush1.msra.mxu0 %v263
        %1488 = vmatprep.subr.mxu0 0.0
        %1489 = vmatpush1.msra.mxu0 %v264
        %1490 = vmatprep.subr.mxu0 0.0
        %1491 = vmatpush1.msra.mxu0 0.0
        %1492 = vmatprep.subr.mxu0 0.0
        %1493 = vmatpush1.msra.mxu0 0.0
        %1494 = vmatprep.subr.mxu0 0.0
        %1495 = vmatpush1.msra.mxu0 0.0
        %1496 = vmatprep.subr.mxu0 0.0
        %1497 = vmatpush1.msra.mxu0 0.0
        %1498 = vmatprep.subr.mxu0 0.0
        %1499 = vmatpush1.msra.mxu0 0.0
        %1500 = vmatprep.subr.mxu0 0.0
        %1501 = vmatpush1.msra.mxu0 0.0
        %1502 = vmatprep.subr.mxu0 0.0
        %1503 = vmatpush1.msra.mxu0 0.0
        %1504 = vmatprep.subr.mxu0 0.0
        %1505 = vmatpush1.msra.mxu0 0.0
        %1506 = vmatprep.subr.mxu0 0.0
        %1507 = vmatpush1.msra.mxu0 0.0
        %1508 = vmatprep.subr.mxu0 0.0
        %1509 = vmatpush1.msra.mxu0 0.0
        %1510 = vmatprep.subr.mxu0 0.0
        %1511 = vmatpush1.msra.mxu0 0.0
        %1512 = vmatprep.subr.mxu0 0.0
        %1513 = vmatpush1.msra.mxu0 0.0
        %1514 = vmatprep.subr.mxu0 0.0
        %1515 = vmatpush1.msra.mxu0 0.0
        %1516 = vmatprep.subr.mxu0 0.0
        %1517 = vmatpush1.msra.mxu0 0.0
        %1518 = vmatprep.subr.mxu0 0.0
        %1519 = vmatpush1.msra.mxu0 0.0
        %1520 = vmatprep.subr.mxu0 0.0
        %1521 = vmatpush1.msra.mxu0 0.0
        %1522 = vmatprep.subr.mxu0 0.0
        %1523 = vmatpush1.msra.mxu0 0.0
        %1524 = vmatprep.subr.mxu0 0.0
        %1525 = vmatpush1.msra.mxu0 0.0
        %1526 = vmatprep.subr.mxu0 0.0
        %1527 = vmatpush1.msra.mxu0 0.0
        %1528 = vmatprep.subr.mxu0 0.0
        %1529 = vmatpush1.msra.mxu0 0.0
        %1530 = vmatprep.subr.mxu0 0.0
        %1531 = vmatpush1.msra.mxu0 0.0
        %1532 = vmatprep.subr.mxu0 0.0
        %1533 = vmatpush1.msra.mxu0 0.0
        %1534 = vmatprep.subr.mxu0 0.0
        %1535 = vmatpush1.msra.mxu0 0.0
        %1536 = vmatprep.subr.mxu0 0.0
        %1537 = vmatpush1.msra.mxu0 0.0
        %1538 = vmatprep.subr.mxu0 0.0
        %1539 = vmatpush1.msra.mxu0 0.0
        %1540 = vmatprep.subr.mxu0 0.0
        %1541 = vmatpush1.msra.mxu0 0.0
        %1542 = vmatprep.subr.mxu0 0.0
        %1543 = vmatpush1.msra.mxu0 0.0
        %1544 = vmatprep.subr.mxu0 0.0
        %1545 = vmatpush1.msra.mxu0 0.0
        %1546 = vmatprep.mubr.f32.mxu0 0.0
        %1547 = vmatmul.mubr.f32.gmra.mrb[0].mxu0 %v1480
        %v1548 = vpop.f32.mrb[0].mxu0
        %v1549 = vadd.f32 0.0, %v1548
        %v1550 = vpop.f32.mrb[0].mxu0
        %1551 = vdwg.mxu0
        %v1552 = vadd.f32 %v1474, %v1549
        %v1553 = vxor.u32 %v1552, 2147483648
        %v1554 = vmul.f32 %v1553, 1.442695
        %v1555 = vpow.pop %v1554
        %v1556 = vadd.f32 %v1555, 1.0
        %v1557 = vrcp.pop %v1556
        %v1558 = vmul.f32 1.0, %v1557
        %1560 = vrot.lane.b32.xlu0 %v1549, 64
        %v1561 = vpop.permute.xlu0 %1560
        %v1563 = vmul.f32 %v1558, %v1561
        %1565 = vrot.lane.b32.xlu0 %v1563, 64
        %v1566 = vpop.permute.xlu0 %1565
        %v1568 = vadd.f32 %v1474, %v1566
        %v1569 = vtanh.pop %v1568
        %v1570 = vsub.f32 1.0, %v1558
        %1572 = vrot.lane.b32.xlu0 %v1569, 96
        %v1573 = vpop.permute.xlu0 %1572
        %v1575 = vmul.f32 %v1570, %v1573
        %v1576 = vmul.f32 %v1558, %v1397
        %v1577 = vadd.f32 %v1575, %v1576
        %vm1578 = vcmp.gt.s32.totalorder %v253, 6
        %v1579 = vsel %vm1578, 1, 0
        %1580 = vset.pattern.permute.xlu0 8
        %1581 = vperm.xlu0 %1580, %v1579
        %v1582 = vpop.permute.xlu0 %1581
        %vm1583 = vcmp.eq.s32.totalorder %v1582, 1
        %v1584 = vsel %vm1583, %v1577, 0.0
        %v1585 = vsel %vm1583, %v1577, %v1397
        %1586 = vset.pattern.permute.xlu0 7
        %1587 = vperm.xlu0 %1586, %v253
        %v1588 = vpop.permute.xlu0 %1587
        %vm1589 = vcmp.eq.s32.totalorder %v1588, %v266
        %v1590 = vsel %vm1589, 1, 0
        %v1591 = vcvt.s32.f32 %v1590
        %v1593 = vsel %vm273, %v1591, 0
        %1595 = vmatprep.subr.mxu0 0.0
        %1596 = vmatpush1.msra.mxu0 %v254
        %1597 = vmatprep.subr.mxu0 0.0
        %1598 = vmatpush1.msra.mxu0 %v255
        %1599 = vmatprep.subr.mxu0 0.0
        %1600 = vmatpush1.msra.mxu0 %v256
        %1601 = vmatprep.subr.mxu0 0.0
        %1602 = vmatpush1.msra.mxu0 %v257
        %1603 = vmatprep.subr.mxu0 0.0
        %1604 = vmatpush1.msra.mxu0 %v258
        %1605 = vmatprep.subr.mxu0 0.0
        %1606 = vmatpush1.msra.mxu0 %v259
        %1607 = vmatprep.subr.mxu0 0.0
        %1608 = vmatpush1.msra.mxu0 %v279
        %1609 = vmatprep.subr.mxu0 0.0
        %1610 = vmatpush1.msra.mxu0 0.0
        %1611 = vmatprep.subr.mxu0 0.0
        %1612 = vmatpush1.msra.mxu0 0.0
        %1613 = vmatprep.subr.mxu0 0.0
        %1614 = vmatpush1.msra.mxu0 0.0
        %1615 = vmatprep.subr.mxu0 0.0
        %1616 = vmatpush1.msra.mxu0 0.0
        %1617 = vmatprep.subr.mxu0 0.0
        %1618 = vmatpush1.msra.mxu0 0.0
        %1619 = vmatprep.subr.mxu0 0.0
        %1620 = vmatpush1.msra.mxu0 0.0
        %1621 = vmatprep.subr.mxu0 0.0
        %1622 = vmatpush1.msra.mxu0 0.0
        %1623 = vmatprep.subr.mxu0 0.0
        %1624 = vmatpush1.msra.mxu0 0.0
        %1625 = vmatprep.subr.mxu0 0.0
        %1626 = vmatpush1.msra.mxu0 0.0
        %1627 = vmatprep.subr.mxu0 0.0
        %1628 = vmatpush1.msra.mxu0 0.0
        %1629 = vmatprep.subr.mxu0 0.0
        %1630 = vmatpush1.msra.mxu0 0.0
        %1631 = vmatprep.subr.mxu0 0.0
        %1632 = vmatpush1.msra.mxu0 0.0
        %1633 = vmatprep.subr.mxu0 0.0
        %1634 = vmatpush1.msra.mxu0 0.0
        %1635 = vmatprep.subr.mxu0 0.0
        %1636 = vmatpush1.msra.mxu0 0.0
        %1637 = vmatprep.subr.mxu0 0.0
        %1638 = vmatpush1.msra.mxu0 0.0
        %1639 = vmatprep.subr.mxu0 0.0
        %1640 = vmatpush1.msra.mxu0 0.0
        %1641 = vmatprep.subr.mxu0 0.0
        %1642 = vmatpush1.msra.mxu0 0.0
        %1643 = vmatprep.subr.mxu0 0.0
        %1644 = vmatpush1.msra.mxu0 0.0
        %1645 = vmatprep.subr.mxu0 0.0
        %1646 = vmatpush1.msra.mxu0 0.0
        %1647 = vmatprep.subr.mxu0 0.0
        %1648 = vmatpush1.msra.mxu0 0.0
        %1649 = vmatprep.subr.mxu0 0.0
        %1650 = vmatpush1.msra.mxu0 0.0
        %1651 = vmatprep.subr.mxu0 0.0
        %1652 = vmatpush1.msra.mxu0 0.0
        %1653 = vmatprep.subr.mxu0 0.0
        %1654 = vmatpush1.msra.mxu0 0.0
        %1655 = vmatprep.subr.mxu0 0.0
        %1656 = vmatpush1.msra.mxu0 0.0
        %1657 = vmatprep.subr.mxu0 0.0
        %1658 = vmatpush1.msra.mxu0 0.0
        %1659 = vmatprep.mubr.f32.mxu0 0.0
        %1660 = vmatmul.mubr.f32.gmra.mrb[0].mxu0 %v1593
        %v1661 = vpop.f32.mrb[0].mxu0
        %v1662 = vadd.f32 0.0, %v1661
        %v1663 = vpop.f32.mrb[0].mxu0
        %1664 = vdwg.mxu0
        %1666 = vrot.lane.b32.xlu0 %v1585, 96
        %v1667 = vpop.permute.xlu0 %1666
        %v1668 = vsel %vm351, %v1667, 0
        %1670 = vmatprep.subr.mxu0 0.0
        %1671 = vmatpush1.msra.mxu0 %v261
        %1672 = vmatprep.subr.mxu0 0.0
        %1673 = vmatpush1.msra.mxu0 %v262
        %1674 = vmatprep.subr.mxu0 0.0
        %1675 = vmatpush1.msra.mxu0 %v263
        %1676 = vmatprep.subr.mxu0 0.0
        %1677 = vmatpush1.msra.mxu0 %v264
        %1678 = vmatprep.subr.mxu0 0.0
        %1679 = vmatpush1.msra.mxu0 0.0
        %1680 = vmatprep.subr.mxu0 0.0
        %1681 = vmatpush1.msra.mxu0 0.0
        %1682 = vmatprep.subr.mxu0 0.0
        %1683 = vmatpush1.msra.mxu0 0.0
        %1684 = vmatprep.subr.mxu0 0.0
        %1685 = vmatpush1.msra.mxu0 0.0
        %1686 = vmatprep.subr.mxu0 0.0
        %1687 = vmatpush1.msra.mxu0 0.0
        %1688 = vmatprep.subr.mxu0 0.0
        %1689 = vmatpush1.msra.mxu0 0.0
        %1690 = vmatprep.subr.mxu0 0.0
        %1691 = vmatpush1.msra.mxu0 0.0
        %1692 = vmatprep.subr.mxu0 0.0
        %1693 = vmatpush1.msra.mxu0 0.0
        %1694 = vmatprep.subr.mxu0 0.0
        %1695 = vmatpush1.msra.mxu0 0.0
        %1696 = vmatprep.subr.mxu0 0.0
        %1697 = vmatpush1.msra.mxu0 0.0
        %1698 = vmatprep.subr.mxu0 0.0
        %1699 = vmatpush1.msra.mxu0 0.0
        %1700 = vmatprep.subr.mxu0 0.0
        %1701 = vmatpush1.msra.mxu0 0.0
        %1702 = vmatprep.subr.mxu0 0.0
        %1703 = vmatpush1.msra.mxu0 0.0
        %1704 = vmatprep.subr.mxu0 0.0
        %1705 = vmatpush1.msra.mxu0 0.0
        %1706 = vmatprep.subr.mxu0 0.0
        %1707 = vmatpush1.msra.mxu0 0.0
        %1708 = vmatprep.subr.mxu0 0.0
        %1709 = vmatpush1.msra.mxu0 0.0
        %1710 = vmatprep.subr.mxu0 0.0
        %1711 = vmatpush1.msra.mxu0 0.0
        %1712 = vmatprep.subr.mxu0 0.0
        %1713 = vmatpush1.msra.mxu0 0.0
        %1714 = vmatprep.subr.mxu0 0.0
        %1715 = vmatpush1.msra.mxu0 0.0
        %1716 = vmatprep.subr.mxu0 0.0
        %1717 = vmatpush1.msra.mxu0 0.0
        %1718 = vmatprep.subr.mxu0 0.0
        %1719 = vmatpush1.msra.mxu0 0.0
        %1720 = vmatprep.subr.mxu0 0.0
        %1721 = vmatpush1.msra.mxu0 0.0
        %1722 = vmatprep.subr.mxu0 0.0
        %1723 = vmatpush1.msra.mxu0 0.0
        %1724 = vmatprep.subr.mxu0 0.0
        %1725 = vmatpush1.msra.mxu0 0.0
        %1726 = vmatprep.subr.mxu0 0.0
        %1727 = vmatpush1.msra.mxu0 0.0
        %1728 = vmatprep.subr.mxu0 0.0
        %1729 = vmatpush1.msra.mxu0 0.0
        %1730 = vmatprep.subr.mxu0 0.0
        %1731 = vmatpush1.msra.mxu0 0.0
        %1732 = vmatprep.subr.mxu0 0.0
        %1733 = vmatpush1.msra.mxu0 0.0
        %1734 = vmatprep.mubr.f32.mxu0 0.0
        %1735 = vmatmul.mubr.f32.gmra.mrb[0].mxu0 %v1668
        %v1736 = vpop.f32.mrb[0].mxu0
        %v1737 = vadd.f32 0.0, %v1736
        %v1738 = vpop.f32.mrb[0].mxu0
        %1739 = vdwg.mxu0
        %v1740 = vadd.f32 %v1662, %v1737
        %v1741 = vxor.u32 %v1740, 2147483648
        %v1742 = vmul.f32 %v1741, 1.442695
        %v1743 = vpow.pop %v1742
        %v1744 = vadd.f32 %v1743, 1.0
        %v1745 = vrcp.pop %v1744
        %v1746 = vmul.f32 1.0, %v1745
        %1748 = vrot.lane.b32.xlu0 %v1737, 64
        %v1749 = vpop.permute.xlu0 %1748
        %v1751 = vmul.f32 %v1746, %v1749
        %1753 = vrot.lane.b32.xlu0 %v1751, 64
        %v1754 = vpop.permute.xlu0 %1753
        %v1756 = vadd.f32 %v1662, %v1754
        %v1757 = vtanh.pop %v1756
        %v1758 = vsub.f32 1.0, %v1746
        %1760 = vrot.lane.b32.xlu0 %v1757, 96
        %v1761 = vpop.permute.xlu0 %1760
        %v1763 = vmul.f32 %v1758, %v1761
        %v1764 = vmul.f32 %v1746, %v1585
        %v1765 = vadd.f32 %v1763, %v1764
        %vm1766 = vcmp.gt.s32.totalorder %v253, 7
        %v1767 = vsel %vm1766, 1, 0
        %1768 = vset.pattern.permute.xlu0 8
        %1769 = vperm.xlu0 %1768, %v1767
        %v1770 = vpop.permute.xlu0 %1769
        %vm1771 = vcmp.eq.s32.totalorder %v1770, 1
        %v1772 = vsel %vm1771, %v1765, 0.0
        %v1773 = vsel %vm1771, %v1765, %v1585
        %1776 = vrot.lane.b32.xlu0 %v832, 32
        %v1777 = vpop.permute.xlu0 %1776
        %1780 = vrot.lane.b32.xlu0 %v1020, 64
        %v1781 = vpop.permute.xlu0 %1780
        %1784 = vrot.lane.b32.xlu0 %v1208, 96
        %v1785 = vpop.permute.xlu0 %1784
        %1788 = vrot.lane.b32.xlu0 %v1584, 32
        %v1789 = vpop.permute.xlu0 %1788
        %1792 = vrot.lane.b32.xlu0 %v1772, 64
        %v1793 = vpop.permute.xlu0 %1792
        %v1795 = vsel %vm351, %v539, %v644
        %vm1796 = vcmask 523264
        %v1797 = vsel %vm1796, %v1795, %v1777
        %vm1798 = vcmask 785408
        %v1799 = vsel %vm1798, %v1797, %v1781
        %v1800 = vsel %vm351, %v1785, %v1396
        %v1801 = vsel %vm1796, %v1800, %v1789
        %v1802 = vsel %vm1798, %v1801, %v1793
        %1803 = vst [vmem:[%s245] sm:$0xff] %v1799
        %1804 = vst [vmem:[%s245 + $0x8] sm:$0xff] %v1802
        %1806 = vrot.lane.b32.xlu0 %v1773, 96
        %v1807 = vpop.permute.xlu0 %1806
        %v1809 = vsel %vm351, %v1807, 0.0
        %1810 = vst [vmem:[%s252] sm:$0xff] %v1809
        %s1811 = sand.u32 %s102, 1
        %s1812 = scalar_lea.sflag [#allocation4], %s1811
        %s1813 = sand.u32 %s102, 1
        %s1814 = smul.addr %s1813, 16
        %s1815 = scalar_lea.vmem [#allocation8], %s1814
        %s1816 = sand.u32 %s128, 1
        %s1817 = scalar_lea.sflag [#allocation10], %s1816
        %s1818 = sand.u32 %s128, 1
        %s1819 = smul.addr %s1818, 8
        %s1820 = scalar_lea.vmem [#allocation9], %s1819
        // Predicated region
        $region45: #{tpu_custom_call.1} parent=31 // pred_check
          %p1821 = pneg %p112
        $region46: #{tpu_custom_call.1} parent=31 // pred_check_branch
          %1823 = sbr.rel (%p1821) target = $region48
        $region47: #{tpu_custom_call.1} parent=31 // pred_region
          %s1825 = ssub.s32 256, 256
          %1826 = vsyncadd %s1812, %s1825
          %s1827 = smul.addr %s26, 2
          %s1828 = smul.addr %s1827, 128
          %s1829 = scalar_lea.hbm %s3, %s1828
          %s1831 = sshll.u32 %s1815, 4
          %s1832 = int_to_ptr.vmem [resolvable:$true] %s1831
          %1834 = dma.vmem_to_hbm [thread:$0]  %s1832, 256, %s1829, %s1812
        $region48: #{tpu_custom_call.1} parent=31 // pred_fallthru
          _
        // Predicated region
        $region49: #{tpu_custom_call.1} parent=31 // pred_check
          %p1835 = pneg %p138
        $region50: #{tpu_custom_call.1} parent=31 // pred_check_branch
          %1837 = sbr.rel (%p1835) target = $region52
        $region51: #{tpu_custom_call.1} parent=31 // pred_region
          %s1839 = ssub.s32 128, 128
          %1840 = vsyncadd %s1817, %s1839
          %s1841 = smul.addr %s26, 128
          %s1842 = scalar_lea.hbm %s4, %s1841
          %s1844 = sshll.u32 %s1820, 4
          %s1845 = int_to_ptr.vmem [resolvable:$true] %s1844
          %1847 = dma.vmem_to_hbm [thread:$0]  %s1845, 128, %s1842, %s1817
        $region52: #{tpu_custom_call.1} parent=31 // pred_fallthru
          _
      $region32: #{tpu_custom_call.1} parent=5 // pred_fallthru
        _
      %p1848 = scmp.le.s32.totalorder 2, %s21
      // Predicated region
      $region53: #{tpu_custom_call.1} parent=5 // pred_check
        %p1849 = pneg %p1848
      $region54: #{tpu_custom_call.1} parent=5 // pred_check_branch
        %1851 = sbr.rel (%p1849) target = $region56
      $region55: #{tpu_custom_call.1} parent=5 // pred_region
        %s1852 = ssub.s32 %s21, 2
        // Predicated region
        $region57: #{tpu_custom_call.1} parent=55 // pred_check
          %p1853 = pneg %p118
        $region58: #{tpu_custom_call.1} parent=55 // pred_check_branch
          %1855 = sbr.rel (%p1853) target = $region60
        $region59: #{tpu_custom_call.1} parent=55 // pred_region
          %s1856 = sand.u32 %s103, 1
          %s1857 = scalar_lea.sflag [#allocation4], %s1856
          %s1858 = sand.u32 %s103, 1
          %s1859 = smul.addr %s1858, 16
          %s1860 = scalar_lea.vmem [#allocation8], %s1859
          %1861 = dma.done %s1857, 256
        $region60: #{tpu_custom_call.1} parent=55 // pred_fallthru
          _
        // Predicated region
        $region61: #{tpu_custom_call.1} parent=55 // pred_check
          %p1862 = pneg %p144
        $region62: #{tpu_custom_call.1} parent=55 // pred_check_branch
          %1864 = sbr.rel (%p1862) target = $region64
        $region63: #{tpu_custom_call.1} parent=55 // pred_region
          %s1865 = sand.u32 %s129, 1
          %s1866 = scalar_lea.sflag [#allocation10], %s1865
          %s1867 = sand.u32 %s129, 1
          %s1868 = smul.addr %s1867, 8
          %s1869 = scalar_lea.vmem [#allocation9], %s1868
          %1870 = dma.done %s1866, 128
        $region64: #{tpu_custom_call.1} parent=55 // pred_fallthru
          _
      $region56: #{tpu_custom_call.1} parent=5 // pred_fallthru
        _
    $region6: #{tpu_custom_call.1} parent=1 // loop_footer
      %s25 = sadd.s32 1, %s21
    $region7: #{tpu_custom_call.1} parent=1 // loop_footer_branch
      %20 = sbr.rel target = $region3
    $region8: #{tpu_custom_call.1} parent=1 // loop_exit
      _
    %1871 = vsyncpa [#allocation3], 1
    %s1872 = scalar_lea.sflag [#allocation3], 1
    %1873 = vsyncpa %s1872, 1
    %1874 = vsyncpa [#allocation6], 1
    %1875 = vsyncpa [#allocation4], 1
    %s1876 = scalar_lea.sflag [#allocation4], 1
    %1877 = vsyncpa %s1876, 1
    %1878 = vsyncpa [#allocation10], 1
    %s1879 = scalar_lea.sflag [#allocation10], 1
    %1880 = vsyncpa %s1879, 1

</llo_original>
